<compile_context>
chip_gen: v7x
topology: tpu7x:2x2x1
jax: 0.10.0
libtpu: 0.0.40
codegen_flags: <defaults>
</compile_context>

<pallas_src>
import math
from functools import partial

import jax
import jax.numpy as jnp
from jax.experimental import pallas as pl
from jax.experimental.pallas import tpu as pltpu

LANE = 128
SUBLANE = 8


def _round_up(n, m):
    return ((n + m - 1) // m) * m


# ------------------------- fused LSTM + FC head kernel -------------------------

def _fused_lstm_fc_kernel(x_ref, *refs, num_layers, T, B_pad, H):
    """Ref order after x_ref:
       inputs : w_ih_0..L-1, w_hh_0..L-1, b_0..L-1, w1, b1, w2, b2
       outputs: out
    x_ref is the time-major, zero-padded input: (T*B_pad, K_in), row = t*B_pad+b.
    """
    L = num_layers
    w_ih = refs[0:L]
    w_hh = refs[L:2 * L]
    b_g = refs[2 * L:3 * L]
    w1_ref, b1_ref, w2_ref, b2_ref, out_ref = refs[3 * L:3 * L + 5]

    G = w_ih[0].shape[1]                 # packed gate lane width (>= 4*H)

    # Packed gate columns [i | f | o | g]: sigmoid on the first 3*H lanes, tanh
    # on the g block.  Mask is hoisted once (iota/broadcast are not CSE'd).
    lane = jax.lax.broadcasted_iota(jnp.int32, (B_pad, G), 1)
    sig_mask = lane < 3 * H

    seq = x_ref[...]                     # (T*B_pad, K_in) time-major
    seq_bf = None
    for l in range(L):
        # (1) Non-recurrent input->gate projection for ALL timesteps: one GEMM,
        #     bias (b_ih + b_hh) folded in once per layer.
        xg = (
            jnp.dot(seq, w_ih[l][...], preferred_element_type=jnp.float32)
            + b_g[l][...]
        )                                # (T*B_pad, G)

        # (2) Serial recurrence: only the small K=H matmul + gate math remain.
        h = jnp.zeros((B_pad, H), jnp.float32)
        c = jnp.zeros((B_pad, H), jnp.float32)
        outs = []
        # TODO(synk): for realistic back_days, switch to lax.fori_loop(unroll=2-4)
        # with xg staged in a VMEM scratch; T is tiny here so full unroll is fine.
        for t in range(T):
            gates = xg[t * B_pad:(t + 1) * B_pad, :] + jnp.dot(
                h, w_hh[l][...], preferred_element_type=jnp.float32
            )                            # (B_pad, G)
            # One sigmoid + one tanh + one select (vs 4 separate gate launches).
            act = jnp.where(sig_mask, jax.nn.sigmoid(gates), jnp.tanh(gates))
            i = act[:, 0 * H:1 * H]
            f = act[:, 1 * H:2 * H]
            o = act[:, 2 * H:3 * H]
            g = act[:, 3 * H:4 * H]
            c = f * c + i * g
            h = o * jnp.tanh(c)
            outs.append(h)

        if l < L - 1:
            seq = jnp.concatenate(outs, axis=0)      # (T*B_pad, H) time-major
        else:
            seq_bf = jnp.concatenate(outs, axis=1)   # (B_pad, T*H) batch-first

    # Fused FC head: tanh(seq_bf @ W1 + b1) @ W2_pad + b2_pad  (lane-dense N=128).
    # TODO(synk): for realistic H/T, stream W1 from HBM (memory_space=pl.ANY +
    # double-buffered make_async_copy tiled over fc1_out) to fit v7x's 64 MiB VMEM.
    hid = jnp.tanh(
        jnp.dot(seq_bf, w1_ref[...], preferred_element_type=jnp.float32)
        + b1_ref[...]
    )
    out_ref[...] = (
        jnp.dot(hid, w2_ref[...], preferred_element_type=jnp.float32) + b2_ref[...]
    )


# --------------------------------- LSTM model ---------------------------------

class Args:
    def __init__(self, back_days, gpu="tpu"):
        self.back_days = back_days
        self.gpu = gpu


class LSTMPallas:
    """Mirrors the PyTorch LSTM module's forward pass (dropout/bn unused there)."""

    # PyTorch stacked-gate order is [i, f, g, o]; kernel packs [i, f, o, g] so
    # the sigmoid gates are contiguous.  kernel block k <- PyTorch gate PERM[k].
    _GATE_PERM = (0, 1, 3, 2)

    def __init__(self, args, input_dim, hidden_dim, num_layers, output_dim, key):
        self.args = args
        self.input_dim = input_dim
        self.hidden_dim = hidden_dim
        self.num_layers = num_layers
        self.output_dim = output_dim

        T = args.back_days
        H = hidden_dim
        self.g_pad = _round_up(4 * H, LANE)      # packed gate lane width
        self.d0_pad = _round_up(input_dim, LANE)  # layer-0 K (safe lane-dense pad)
        self.out_pad = _round_up(output_dim, LANE)

        bound = 1.0 / math.sqrt(H)
        keys = jax.random.split(key, num_layers * 4 + 4)
        ki = iter(range(len(keys)))

        def u(k, shape, bnd):
            return jax.random.uniform(keys[k], shape, jnp.float32, -bnd, bnd)

        # LSTM params: PyTorch-layout copies for the reference + packed,
        # gate-reordered copies for the kernel (zeros in padding rows/cols).
        self.lstm_params = []     # (w_ih^T, w_hh^T, bias[1,4H]) PyTorch order
        self.w_ih_pads, self.w_hh_pads, self.b_pads = [], [], []
        for layer in range(num_layers):
            d_in = input_dim if layer == 0 else H
            k_in = self.d0_pad if layer == 0 else H
            w_ih = u(next(ki), (4 * H, d_in), bound)   # weight_ih_l{layer}
            w_hh = u(next(ki), (4 * H, H), bound)      # weight_hh_l{layer}
            b_ih = u(next(ki), (4 * H,), bound)
            b_hh = u(next(ki), (4 * H,), bound)
            wih_t, whh_t, bias = w_ih.T, w_hh.T, b_ih + b_hh
            self.lstm_params.append((wih_t, whh_t, bias[None, :]))

            wi = jnp.zeros((k_in, self.g_pad), jnp.float32)
            wh = jnp.zeros((H, self.g_pad), jnp.float32)
            bp = jnp.zeros((1, self.g_pad), jnp.float32)
            for dst, src in enumerate(self._GATE_PERM):
                wi = wi.at[:d_in, dst * H:(dst + 1) * H].set(
                    wih_t[:, src * H:(src + 1) * H])
                wh = wh.at[:, dst * H:(dst + 1) * H].set(
                    whh_t[:, src * H:(src + 1) * H])
                bp = bp.at[0, dst * H:(dst + 1) * H].set(
                    bias[src * H:(src + 1) * H])
            self.w_ih_pads.append(wi)
            self.w_hh_pads.append(wh)
            self.b_pads.append(bp)

        # FC head params (PyTorch nn.Linear init bounds).
        fc1_in = T * H
        fc1_out = fc1_in // 2
        b1_bound = 1.0 / math.sqrt(fc1_in)
        b2_bound = 1.0 / math.sqrt(fc1_out)
        self.w1_t = u(next(ki), (fc1_in, fc1_out), b1_bound)   # dense: seq is H-dense
        self.b1 = u(next(ki), (1, fc1_out), b1_bound)
        self.w2_t = u(next(ki), (fc1_out, output_dim), b2_bound)
        self.b2 = u(next(ki), (1, output_dim), b2_bound)

        # Lane-dense final store: pad fc2 to 128 output columns (zeros); the
        # wrapper slices [:, :output_dim].
        self.w2_pad = jnp.zeros((fc1_out, self.out_pad), jnp.float32
                                ).at[:, :output_dim].set(self.w2_t)
        self.b2_pad = jnp.zeros((1, self.out_pad), jnp.float32
                                ).at[0, :output_dim].set(self.b2[0])

        # TODO(synk): bf16 weights / matmul operands (f32 accumulation) would halve
        # VMEM/HBM traffic on v6e/v7x; kept f32 to match the f32 PyTorch reference.

    def forward(self, x):
        # x: (B, T, input_dim), batch_first like PyTorch.
        B, T, D = x.shape
        assert T == self.args.back_days and D == self.input_dim
        B_pad = _round_up(B, SUBLANE)
        H = self.hidden_dim
        L = self.num_layers

        # One-time layout prep (XLA side, tiny): time-major rows (row = t*B_pad+b)
        # so the layer-0 input->gate projection is a single (T*B_pad, K) GEMM.
        x_tm = jnp.transpose(x, (1, 0, 2))
        x_tm = jnp.pad(x_tm, ((0, 0), (0, B_pad - B), (0, self.d0_pad - D)))
        x_tm = x_tm.reshape(T * B_pad, self.d0_pad)

        kernel = partial(
            _fused_lstm_fc_kernel, num_layers=L, T=T, B_pad=B_pad, H=H,
        )
        # TODO(synk): for realistic batch sizes, add a batch-tile grid axis with
        # dimension_semantics=("parallel",) so v7x's 2 TensorCores split B.
        out = pl.pallas_call(
            kernel,
            out_shape=jax.ShapeDtypeStruct((B_pad, self.out_pad), jnp.float32),
            compiler_params=pltpu.CompilerParams(
                vmem_limit_bytes=32 * 1024 * 1024),   # explicit; scale with model
        )(x_tm, *self.w_ih_pads, *self.w_hh_pads, *self.b_pads,
          self.w1_t, self.b1, self.w2_pad, self.b2_pad)
        return out[:B, :self.output_dim]


# --------------------------- pure-JAX reference check --------------------------

def reference_forward(model, x):
    B, T, _ = x.shape
    H = model.hidden_dim
    seq = jnp.transpose(x, (1, 0, 2))
    for (wih_t, whh_t, b) in model.lstm_params:
        def step(carry, x_t):
            h, c = carry
            gates = x_t @ wih_t + h @ whh_t + b
            i = jax.nn.sigmoid(gates[:, 0 * H:1 * H])
            f = jax.nn.sigmoid(gates[:, 1 * H:2 * H])
            g = jnp.tanh(gates[:, 2 * H:3 * H])
            o = jax.nn.sigmoid(gates[:, 3 * H:4 * H])
            c = f * c + i * g
            h = o * jnp.tanh(c)
            return (h, c), h
        h0 = jnp.zeros((B, H), jnp.float32)
        c0 = jnp.zeros((B, H), jnp.float32)
        _, seq = jax.lax.scan(step, (h0, c0), seq)
    out = jnp.transpose(seq, (1, 0, 2)).reshape(B, T * H)
    h = jnp.tanh(out @ model.w1_t + model.b1)
    return h @ model.w2_t + model.b2


# ------------------------------------ main ------------------------------------

if __name__ == "__main__":
    B, T, INPUT_DIM, HIDDEN, LAYERS, OUT_DIM = 2, 8, 4, 32, 2, 3
    args = Args(back_days=T)

    key = jax.random.PRNGKey(0)
    k_model, k_x = jax.random.split(key)
    model = LSTMPallas(args, INPUT_DIM, HIDDEN, LAYERS, OUT_DIM, k_model)

    x = jax.random.normal(k_x, (B, T, INPUT_DIM), jnp.float32)

    y = jax.block_until_ready(model.forward(x))
    y_ref = jax.block_until_ready(reference_forward(model, x))

    assert y.shape == (B, OUT_DIM)
    assert jnp.allclose(y, y_ref, atol=1e-4, rtol=1e-4), "mismatch vs reference"

    print("KERNEL_OK")
</pallas_src>

<mosaic_0001>
module attributes {stable_mosaic.version = 11 : i64} {
  func.func @_fused_lstm_fc_kernel(%arg0: memref<64x128xf32, #tpu.memory_space<vmem>>, %arg1: memref<128x128xf32, #tpu.memory_space<vmem>>, %arg2: memref<32x128xf32, #tpu.memory_space<vmem>>, %arg3: memref<32x128xf32, #tpu.memory_space<vmem>>, %arg4: memref<32x128xf32, #tpu.memory_space<vmem>>, %arg5: memref<1x128xf32, #tpu.memory_space<vmem>>, %arg6: memref<1x128xf32, #tpu.memory_space<vmem>>, %arg7: memref<256x128xf32, #tpu.memory_space<vmem>>, %arg8: memref<1x128xf32, #tpu.memory_space<vmem>>, %arg9: memref<128x128xf32, #tpu.memory_space<vmem>>, %arg10: memref<1x128xf32, #tpu.memory_space<vmem>>, %arg11: memref<8x128xf32, #tpu.memory_space<vmem>>) attributes {dimension_semantics = [], scalar_prefetch = 0 : i64, scratch_operands = 0 : i64, tpu.core_type = #tpu.core_type<tc>} {
    %0 = tpu.iota {dimensions = array<i32: 1>} : vector<8x128xi32>
    %c96_i32 = arith.constant 96 : i32
    %1 = vector.broadcast %c96_i32 : i32 to vector<8x128xi32>
    %2 = arith.cmpi slt, %0, %1 : vector<8x128xi32>
    %c0 = arith.constant 0 : index
    %c0_0 = arith.constant 0 : index
    %3 = vector.load %arg0[%c0, %c0_0] : memref<64x128xf32, #tpu.memory_space<vmem>>, vector<64x128xf32>
    %c0_1 = arith.constant 0 : index
    %c0_2 = arith.constant 0 : index
    %4 = vector.load %arg1[%c0_1, %c0_2] : memref<128x128xf32, #tpu.memory_space<vmem>>, vector<128x128xf32>
    %cst = arith.constant dense<0.000000e+00> : vector<64x128xf32>
    %5 = tpu.matmul %3, %4, %cst {dimension_numbers = #tpu.dot_dimension_numbers<[1], [0], [0], [1], [0, 0, 1, 1], [], []>} : vector<64x128xf32>, vector<128x128xf32>, vector<64x128xf32> -> vector<64x128xf32>
    %c0_3 = arith.constant 0 : index
    %c0_4 = arith.constant 0 : index
    %6 = vector.load %arg5[%c0_3, %c0_4] : memref<1x128xf32, #tpu.memory_space<vmem>>, vector<1x128xf32>
    %7 = vector.broadcast %6 : vector<1x128xf32> to vector<64x128xf32>
    %8 = arith.addf %5, %7 : vector<64x128xf32>
    %cst_5 = arith.constant 0.000000e+00 : f32
    %9 = vector.broadcast %cst_5 : f32 to vector<8x32xf32>
    %cst_6 = arith.constant 0.000000e+00 : f32
    %10 = vector.broadcast %cst_6 : f32 to vector<8x32xf32>
    %11 = vector.extract_strided_slice %8 {offsets = [0, 0], sizes = [8, 128], strides = [1, 1]} : vector<64x128xf32> to vector<8x128xf32>
    %c0_7 = arith.constant 0 : index
    %c0_8 = arith.constant 0 : index
    %12 = vector.load %arg3[%c0_7, %c0_8] : memref<32x128xf32, #tpu.memory_space<vmem>>, vector<32x128xf32>
    %cst_9 = arith.constant dense<0.000000e+00> : vector<8x128xf32>
    %13 = tpu.matmul %9, %12, %cst_9 {dimension_numbers = #tpu.dot_dimension_numbers<[1], [0], [0], [1], [0, 0, 1, 1], [], []>} : vector<8x32xf32>, vector<32x128xf32>, vector<8x128xf32> -> vector<8x128xf32>
    %14 = arith.addf %11, %13 : vector<8x128xf32>
    %15 = arith.negf %14 : vector<8x128xf32>
    %16 = math.exp %15 : vector<8x128xf32>
    %cst_10 = arith.constant 1.000000e+00 : f32
    %17 = vector.broadcast %cst_10 : f32 to vector<8x128xf32>
    %18 = arith.addf %17, %16 : vector<8x128xf32>
    %19 = arith.divf %17, %18 : vector<8x128xf32>
    %20 = math.tanh %14 : vector<8x128xf32>
    %21 = arith.select %2, %19, %20 : vector<8x128xi1>, vector<8x128xf32>
    %22 = vector.extract_strided_slice %21 {offsets = [0, 0], sizes = [8, 32], strides = [1, 1]} : vector<8x128xf32> to vector<8x32xf32>
    %23 = vector.extract_strided_slice %21 {offsets = [0, 32], sizes = [8, 32], strides = [1, 1]} : vector<8x128xf32> to vector<8x32xf32>
    %24 = vector.extract_strided_slice %21 {offsets = [0, 64], sizes = [8, 32], strides = [1, 1]} : vector<8x128xf32> to vector<8x32xf32>
    %25 = vector.extract_strided_slice %21 {offsets = [0, 96], sizes = [8, 32], strides = [1, 1]} : vector<8x128xf32> to vector<8x32xf32>
    %26 = arith.mulf %23, %10 : vector<8x32xf32>
    %27 = arith.mulf %22, %25 : vector<8x32xf32>
    %28 = arith.addf %26, %27 : vector<8x32xf32>
    %29 = math.tanh %28 : vector<8x32xf32>
    %30 = arith.mulf %24, %29 : vector<8x32xf32>
    %31 = vector.extract_strided_slice %8 {offsets = [8, 0], sizes = [8, 128], strides = [1, 1]} : vector<64x128xf32> to vector<8x128xf32>
    %c0_11 = arith.constant 0 : index
    %c0_12 = arith.constant 0 : index
    %32 = vector.load %arg3[%c0_11, %c0_12] : memref<32x128xf32, #tpu.memory_space<vmem>>, vector<32x128xf32>
    %cst_13 = arith.constant dense<0.000000e+00> : vector<8x128xf32>
    %33 = tpu.matmul %30, %32, %cst_13 {dimension_numbers = #tpu.dot_dimension_numbers<[1], [0], [0], [1], [0, 0, 1, 1], [], []>} : vector<8x32xf32>, vector<32x128xf32>, vector<8x128xf32> -> vector<8x128xf32>
    %34 = arith.addf %31, %33 : vector<8x128xf32>
    %35 = arith.negf %34 : vector<8x128xf32>
    %36 = math.exp %35 : vector<8x128xf32>
    %cst_14 = arith.constant 1.000000e+00 : f32
    %37 = vector.broadcast %cst_14 : f32 to vector<8x128xf32>
    %38 = arith.addf %37, %36 : vector<8x128xf32>
    %39 = arith.divf %37, %38 : vector<8x128xf32>
    %40 = math.tanh %34 : vector<8x128xf32>
    %41 = arith.select %2, %39, %40 : vector<8x128xi1>, vector<8x128xf32>
    %42 = vector.extract_strided_slice %41 {offsets = [0, 0], sizes = [8, 32], strides = [1, 1]} : vector<8x128xf32> to vector<8x32xf32>
    %43 = vector.extract_strided_slice %41 {offsets = [0, 32], sizes = [8, 32], strides = [1, 1]} : vector<8x128xf32> to vector<8x32xf32>
    %44 = vector.extract_strided_slice %41 {offsets = [0, 64], sizes = [8, 32], strides = [1, 1]} : vector<8x128xf32> to vector<8x32xf32>
    %45 = vector.extract_strided_slice %41 {offsets = [0, 96], sizes = [8, 32], strides = [1, 1]} : vector<8x128xf32> to vector<8x32xf32>
    %46 = arith.mulf %43, %28 : vector<8x32xf32>
    %47 = arith.mulf %42, %45 : vector<8x32xf32>
    %48 = arith.addf %46, %47 : vector<8x32xf32>
    %49 = math.tanh %48 : vector<8x32xf32>
    %50 = arith.mulf %44, %49 : vector<8x32xf32>
    %51 = vector.extract_strided_slice %8 {offsets = [16, 0], sizes = [8, 128], strides = [1, 1]} : vector<64x128xf32> to vector<8x128xf32>
    %c0_15 = arith.constant 0 : index
    %c0_16 = arith.constant 0 : index
    %52 = vector.load %arg3[%c0_15, %c0_16] : memref<32x128xf32, #tpu.memory_space<vmem>>, vector<32x128xf32>
    %cst_17 = arith.constant dense<0.000000e+00> : vector<8x128xf32>
    %53 = tpu.matmul %50, %52, %cst_17 {dimension_numbers = #tpu.dot_dimension_numbers<[1], [0], [0], [1], [0, 0, 1, 1], [], []>} : vector<8x32xf32>, vector<32x128xf32>, vector<8x128xf32> -> vector<8x128xf32>
    %54 = arith.addf %51, %53 : vector<8x128xf32>
    %55 = arith.negf %54 : vector<8x128xf32>
    %56 = math.exp %55 : vector<8x128xf32>
    %cst_18 = arith.constant 1.000000e+00 : f32
    %57 = vector.broadcast %cst_18 : f32 to vector<8x128xf32>
    %58 = arith.addf %57, %56 : vector<8x128xf32>
    %59 = arith.divf %57, %58 : vector<8x128xf32>
    %60 = math.tanh %54 : vector<8x128xf32>
    %61 = arith.select %2, %59, %60 : vector<8x128xi1>, vector<8x128xf32>
    %62 = vector.extract_strided_slice %61 {offsets = [0, 0], sizes = [8, 32], strides = [1, 1]} : vector<8x128xf32> to vector<8x32xf32>
    %63 = vector.extract_strided_slice %61 {offsets = [0, 32], sizes = [8, 32], strides = [1, 1]} : vector<8x128xf32> to vector<8x32xf32>
    %64 = vector.extract_strided_slice %61 {offsets = [0, 64], sizes = [8, 32], strides = [1, 1]} : vector<8x128xf32> to vector<8x32xf32>
    %65 = vector.extract_strided_slice %61 {offsets = [0, 96], sizes = [8, 32], strides = [1, 1]} : vector<8x128xf32> to vector<8x32xf32>
    %66 = arith.mulf %63, %48 : vector<8x32xf32>
    %67 = arith.mulf %62, %65 : vector<8x32xf32>
    %68 = arith.addf %66, %67 : vector<8x32xf32>
    %69 = math.tanh %68 : vector<8x32xf32>
    %70 = arith.mulf %64, %69 : vector<8x32xf32>
    %71 = vector.extract_strided_slice %8 {offsets = [24, 0], sizes = [8, 128], strides = [1, 1]} : vector<64x128xf32> to vector<8x128xf32>
    %c0_19 = arith.constant 0 : index
    %c0_20 = arith.constant 0 : index
    %72 = vector.load %arg3[%c0_19, %c0_20] : memref<32x128xf32, #tpu.memory_space<vmem>>, vector<32x128xf32>
    %cst_21 = arith.constant dense<0.000000e+00> : vector<8x128xf32>
    %73 = tpu.matmul %70, %72, %cst_21 {dimension_numbers = #tpu.dot_dimension_numbers<[1], [0], [0], [1], [0, 0, 1, 1], [], []>} : vector<8x32xf32>, vector<32x128xf32>, vector<8x128xf32> -> vector<8x128xf32>
    %74 = arith.addf %71, %73 : vector<8x128xf32>
    %75 = arith.negf %74 : vector<8x128xf32>
    %76 = math.exp %75 : vector<8x128xf32>
    %cst_22 = arith.constant 1.000000e+00 : f32
    %77 = vector.broadcast %cst_22 : f32 to vector<8x128xf32>
    %78 = arith.addf %77, %76 : vector<8x128xf32>
    %79 = arith.divf %77, %78 : vector<8x128xf32>
    %80 = math.tanh %74 : vector<8x128xf32>
    %81 = arith.select %2, %79, %80 : vector<8x128xi1>, vector<8x128xf32>
    %82 = vector.extract_strided_slice %81 {offsets = [0, 0], sizes = [8, 32], strides = [1, 1]} : vector<8x128xf32> to vector<8x32xf32>
    %83 = vector.extract_strided_slice %81 {offsets = [0, 32], sizes = [8, 32], strides = [1, 1]} : vector<8x128xf32> to vector<8x32xf32>
    %84 = vector.extract_strided_slice %81 {offsets = [0, 64], sizes = [8, 32], strides = [1, 1]} : vector<8x128xf32> to vector<8x32xf32>
    %85 = vector.extract_strided_slice %81 {offsets = [0, 96], sizes = [8, 32], strides = [1, 1]} : vector<8x128xf32> to vector<8x32xf32>
    %86 = arith.mulf %83, %68 : vector<8x32xf32>
    %87 = arith.mulf %82, %85 : vector<8x32xf32>
    %88 = arith.addf %86, %87 : vector<8x32xf32>
    %89 = math.tanh %88 : vector<8x32xf32>
    %90 = arith.mulf %84, %89 : vector<8x32xf32>
    %91 = vector.extract_strided_slice %8 {offsets = [32, 0], sizes = [8, 128], strides = [1, 1]} : vector<64x128xf32> to vector<8x128xf32>
    %c0_23 = arith.constant 0 : index
    %c0_24 = arith.constant 0 : index
    %92 = vector.load %arg3[%c0_23, %c0_24] : memref<32x128xf32, #tpu.memory_space<vmem>>, vector<32x128xf32>
    %cst_25 = arith.constant dense<0.000000e+00> : vector<8x128xf32>
    %93 = tpu.matmul %90, %92, %cst_25 {dimension_numbers = #tpu.dot_dimension_numbers<[1], [0], [0], [1], [0, 0, 1, 1], [], []>} : vector<8x32xf32>, vector<32x128xf32>, vector<8x128xf32> -> vector<8x128xf32>
    %94 = arith.addf %91, %93 : vector<8x128xf32>
    %95 = arith.negf %94 : vector<8x128xf32>
    %96 = math.exp %95 : vector<8x128xf32>
    %cst_26 = arith.constant 1.000000e+00 : f32
    %97 = vector.broadcast %cst_26 : f32 to vector<8x128xf32>
    %98 = arith.addf %97, %96 : vector<8x128xf32>
    %99 = arith.divf %97, %98 : vector<8x128xf32>
    %100 = math.tanh %94 : vector<8x128xf32>
    %101 = arith.select %2, %99, %100 : vector<8x128xi1>, vector<8x128xf32>
    %102 = vector.extract_strided_slice %101 {offsets = [0, 0], sizes = [8, 32], strides = [1, 1]} : vector<8x128xf32> to vector<8x32xf32>
    %103 = vector.extract_strided_slice %101 {offsets = [0, 32], sizes = [8, 32], strides = [1, 1]} : vector<8x128xf32> to vector<8x32xf32>
    %104 = vector.extract_strided_slice %101 {offsets = [0, 64], sizes = [8, 32], strides = [1, 1]} : vector<8x128xf32> to vector<8x32xf32>
    %105 = vector.extract_strided_slice %101 {offsets = [0, 96], sizes = [8, 32], strides = [1, 1]} : vector<8x128xf32> to vector<8x32xf32>
    %106 = arith.mulf %103, %88 : vector<8x32xf32>
    %107 = arith.mulf %102, %105 : vector<8x32xf32>
    %108 = arith.addf %106, %107 : vector<8x32xf32>
    %109 = math.tanh %108 : vector<8x32xf32>
    %110 = arith.mulf %104, %109 : vector<8x32xf32>
    %111 = vector.extract_strided_slice %8 {offsets = [40, 0], sizes = [8, 128], strides = [1, 1]} : vector<64x128xf32> to vector<8x128xf32>
    %c0_27 = arith.constant 0 : index
    %c0_28 = arith.constant 0 : index
    %112 = vector.load %arg3[%c0_27, %c0_28] : memref<32x128xf32, #tpu.memory_space<vmem>>, vector<32x128xf32>
    %cst_29 = arith.constant dense<0.000000e+00> : vector<8x128xf32>
    %113 = tpu.matmul %110, %112, %cst_29 {dimension_numbers = #tpu.dot_dimension_numbers<[1], [0], [0], [1], [0, 0, 1, 1], [], []>} : vector<8x32xf32>, vector<32x128xf32>, vector<8x128xf32> -> vector<8x128xf32>
    %114 = arith.addf %111, %113 : vector<8x128xf32>
    %115 = arith.negf %114 : vector<8x128xf32>
    %116 = math.exp %115 : vector<8x128xf32>
    %cst_30 = arith.constant 1.000000e+00 : f32
    %117 = vector.broadcast %cst_30 : f32 to vector<8x128xf32>
    %118 = arith.addf %117, %116 : vector<8x128xf32>
    %119 = arith.divf %117, %118 : vector<8x128xf32>
    %120 = math.tanh %114 : vector<8x128xf32>
    %121 = arith.select %2, %119, %120 : vector<8x128xi1>, vector<8x128xf32>
    %122 = vector.extract_strided_slice %121 {offsets = [0, 0], sizes = [8, 32], strides = [1, 1]} : vector<8x128xf32> to vector<8x32xf32>
    %123 = vector.extract_strided_slice %121 {offsets = [0, 32], sizes = [8, 32], strides = [1, 1]} : vector<8x128xf32> to vector<8x32xf32>
    %124 = vector.extract_strided_slice %121 {offsets = [0, 64], sizes = [8, 32], strides = [1, 1]} : vector<8x128xf32> to vector<8x32xf32>
    %125 = vector.extract_strided_slice %121 {offsets = [0, 96], sizes = [8, 32], strides = [1, 1]} : vector<8x128xf32> to vector<8x32xf32>
    %126 = arith.mulf %123, %108 : vector<8x32xf32>
    %127 = arith.mulf %122, %125 : vector<8x32xf32>
    %128 = arith.addf %126, %127 : vector<8x32xf32>
    %129 = math.tanh %128 : vector<8x32xf32>
    %130 = arith.mulf %124, %129 : vector<8x32xf32>
    %131 = vector.extract_strided_slice %8 {offsets = [48, 0], sizes = [8, 128], strides = [1, 1]} : vector<64x128xf32> to vector<8x128xf32>
    %c0_31 = arith.constant 0 : index
    %c0_32 = arith.constant 0 : index
    %132 = vector.load %arg3[%c0_31, %c0_32] : memref<32x128xf32, #tpu.memory_space<vmem>>, vector<32x128xf32>
    %cst_33 = arith.constant dense<0.000000e+00> : vector<8x128xf32>
    %133 = tpu.matmul %130, %132, %cst_33 {dimension_numbers = #tpu.dot_dimension_numbers<[1], [0], [0], [1], [0, 0, 1, 1], [], []>} : vector<8x32xf32>, vector<32x128xf32>, vector<8x128xf32> -> vector<8x128xf32>
    %134 = arith.addf %131, %133 : vector<8x128xf32>
    %135 = arith.negf %134 : vector<8x128xf32>
    %136 = math.exp %135 : vector<8x128xf32>
    %cst_34 = arith.constant 1.000000e+00 : f32
    %137 = vector.broadcast %cst_34 : f32 to vector<8x128xf32>
    %138 = arith.addf %137, %136 : vector<8x128xf32>
    %139 = arith.divf %137, %138 : vector<8x128xf32>
    %140 = math.tanh %134 : vector<8x128xf32>
    %141 = arith.select %2, %139, %140 : vector<8x128xi1>, vector<8x128xf32>
    %142 = vector.extract_strided_slice %141 {offsets = [0, 0], sizes = [8, 32], strides = [1, 1]} : vector<8x128xf32> to vector<8x32xf32>
    %143 = vector.extract_strided_slice %141 {offsets = [0, 32], sizes = [8, 32], strides = [1, 1]} : vector<8x128xf32> to vector<8x32xf32>
    %144 = vector.extract_strided_slice %141 {offsets = [0, 64], sizes = [8, 32], strides = [1, 1]} : vector<8x128xf32> to vector<8x32xf32>
    %145 = vector.extract_strided_slice %141 {offsets = [0, 96], sizes = [8, 32], strides = [1, 1]} : vector<8x128xf32> to vector<8x32xf32>
    %146 = arith.mulf %143, %128 : vector<8x32xf32>
    %147 = arith.mulf %142, %145 : vector<8x32xf32>
    %148 = arith.addf %146, %147 : vector<8x32xf32>
    %149 = math.tanh %148 : vector<8x32xf32>
    %150 = arith.mulf %144, %149 : vector<8x32xf32>
    %151 = vector.extract_strided_slice %8 {offsets = [56, 0], sizes = [8, 128], strides = [1, 1]} : vector<64x128xf32> to vector<8x128xf32>
    %c0_35 = arith.constant 0 : index
    %c0_36 = arith.constant 0 : index
    %152 = vector.load %arg3[%c0_35, %c0_36] : memref<32x128xf32, #tpu.memory_space<vmem>>, vector<32x128xf32>
    %cst_37 = arith.constant dense<0.000000e+00> : vector<8x128xf32>
    %153 = tpu.matmul %150, %152, %cst_37 {dimension_numbers = #tpu.dot_dimension_numbers<[1], [0], [0], [1], [0, 0, 1, 1], [], []>} : vector<8x32xf32>, vector<32x128xf32>, vector<8x128xf32> -> vector<8x128xf32>
    %154 = arith.addf %151, %153 : vector<8x128xf32>
    %155 = arith.negf %154 : vector<8x128xf32>
    %156 = math.exp %155 : vector<8x128xf32>
    %cst_38 = arith.constant 1.000000e+00 : f32
    %157 = vector.broadcast %cst_38 : f32 to vector<8x128xf32>
    %158 = arith.addf %157, %156 : vector<8x128xf32>
    %159 = arith.divf %157, %158 : vector<8x128xf32>
    %160 = math.tanh %154 : vector<8x128xf32>
    %161 = arith.select %2, %159, %160 : vector<8x128xi1>, vector<8x128xf32>
    %162 = vector.extract_strided_slice %161 {offsets = [0, 0], sizes = [8, 32], strides = [1, 1]} : vector<8x128xf32> to vector<8x32xf32>
    %163 = vector.extract_strided_slice %161 {offsets = [0, 32], sizes = [8, 32], strides = [1, 1]} : vector<8x128xf32> to vector<8x32xf32>
    %164 = vector.extract_strided_slice %161 {offsets = [0, 64], sizes = [8, 32], strides = [1, 1]} : vector<8x128xf32> to vector<8x32xf32>
    %165 = vector.extract_strided_slice %161 {offsets = [0, 96], sizes = [8, 32], strides = [1, 1]} : vector<8x128xf32> to vector<8x32xf32>
    %166 = arith.mulf %163, %148 : vector<8x32xf32>
    %167 = arith.mulf %162, %165 : vector<8x32xf32>
    %168 = arith.addf %166, %167 : vector<8x32xf32>
    %169 = math.tanh %168 : vector<8x32xf32>
    %170 = arith.mulf %164, %169 : vector<8x32xf32>
    %171 = tpu.concatenate %30, %50, %70, %90, %110, %130, %150, %170 in 0 : vector<8x32xf32>, vector<8x32xf32>, vector<8x32xf32>, vector<8x32xf32>, vector<8x32xf32>, vector<8x32xf32>, vector<8x32xf32>, vector<8x32xf32> -> vector<64x32xf32>
    %c0_39 = arith.constant 0 : index
    %c0_40 = arith.constant 0 : index
    %172 = vector.load %arg2[%c0_39, %c0_40] : memref<32x128xf32, #tpu.memory_space<vmem>>, vector<32x128xf32>
    %cst_41 = arith.constant dense<0.000000e+00> : vector<64x128xf32>
    %173 = tpu.matmul %171, %172, %cst_41 {dimension_numbers = #tpu.dot_dimension_numbers<[1], [0], [0], [1], [0, 0, 1, 1], [], []>} : vector<64x32xf32>, vector<32x128xf32>, vector<64x128xf32> -> vector<64x128xf32>
    %c0_42 = arith.constant 0 : index
    %c0_43 = arith.constant 0 : index
    %174 = vector.load %arg6[%c0_42, %c0_43] : memref<1x128xf32, #tpu.memory_space<vmem>>, vector<1x128xf32>
    %175 = vector.broadcast %174 : vector<1x128xf32> to vector<64x128xf32>
    %176 = arith.addf %173, %175 : vector<64x128xf32>
    %cst_44 = arith.constant 0.000000e+00 : f32
    %177 = vector.broadcast %cst_44 : f32 to vector<8x32xf32>
    %cst_45 = arith.constant 0.000000e+00 : f32
    %178 = vector.broadcast %cst_45 : f32 to vector<8x32xf32>
    %179 = vector.extract_strided_slice %176 {offsets = [0, 0], sizes = [8, 128], strides = [1, 1]} : vector<64x128xf32> to vector<8x128xf32>
    %c0_46 = arith.constant 0 : index
    %c0_47 = arith.constant 0 : index
    %180 = vector.load %arg4[%c0_46, %c0_47] : memref<32x128xf32, #tpu.memory_space<vmem>>, vector<32x128xf32>
    %cst_48 = arith.constant dense<0.000000e+00> : vector<8x128xf32>
    %181 = tpu.matmul %177, %180, %cst_48 {dimension_numbers = #tpu.dot_dimension_numbers<[1], [0], [0], [1], [0, 0, 1, 1], [], []>} : vector<8x32xf32>, vector<32x128xf32>, vector<8x128xf32> -> vector<8x128xf32>
    %182 = arith.addf %179, %181 : vector<8x128xf32>
    %183 = arith.negf %182 : vector<8x128xf32>
    %184 = math.exp %183 : vector<8x128xf32>
    %cst_49 = arith.constant 1.000000e+00 : f32
    %185 = vector.broadcast %cst_49 : f32 to vector<8x128xf32>
    %186 = arith.addf %185, %184 : vector<8x128xf32>
    %187 = arith.divf %185, %186 : vector<8x128xf32>
    %188 = math.tanh %182 : vector<8x128xf32>
    %189 = arith.select %2, %187, %188 : vector<8x128xi1>, vector<8x128xf32>
    %190 = vector.extract_strided_slice %189 {offsets = [0, 0], sizes = [8, 32], strides = [1, 1]} : vector<8x128xf32> to vector<8x32xf32>
    %191 = vector.extract_strided_slice %189 {offsets = [0, 32], sizes = [8, 32], strides = [1, 1]} : vector<8x128xf32> to vector<8x32xf32>
    %192 = vector.extract_strided_slice %189 {offsets = [0, 64], sizes = [8, 32], strides = [1, 1]} : vector<8x128xf32> to vector<8x32xf32>
    %193 = vector.extract_strided_slice %189 {offsets = [0, 96], sizes = [8, 32], strides = [1, 1]} : vector<8x128xf32> to vector<8x32xf32>
    %194 = arith.mulf %191, %178 : vector<8x32xf32>
    %195 = arith.mulf %190, %193 : vector<8x32xf32>
    %196 = arith.addf %194, %195 : vector<8x32xf32>
    %197 = math.tanh %196 : vector<8x32xf32>
    %198 = arith.mulf %192, %197 : vector<8x32xf32>
    %199 = vector.extract_strided_slice %176 {offsets = [8, 0], sizes = [8, 128], strides = [1, 1]} : vector<64x128xf32> to vector<8x128xf32>
    %c0_50 = arith.constant 0 : index
    %c0_51 = arith.constant 0 : index
    %200 = vector.load %arg4[%c0_50, %c0_51] : memref<32x128xf32, #tpu.memory_space<vmem>>, vector<32x128xf32>
    %cst_52 = arith.constant dense<0.000000e+00> : vector<8x128xf32>
    %201 = tpu.matmul %198, %200, %cst_52 {dimension_numbers = #tpu.dot_dimension_numbers<[1], [0], [0], [1], [0, 0, 1, 1], [], []>} : vector<8x32xf32>, vector<32x128xf32>, vector<8x128xf32> -> vector<8x128xf32>
    %202 = arith.addf %199, %201 : vector<8x128xf32>
    %203 = arith.negf %202 : vector<8x128xf32>
    %204 = math.exp %203 : vector<8x128xf32>
    %cst_53 = arith.constant 1.000000e+00 : f32
    %205 = vector.broadcast %cst_53 : f32 to vector<8x128xf32>
    %206 = arith.addf %205, %204 : vector<8x128xf32>
    %207 = arith.divf %205, %206 : vector<8x128xf32>
    %208 = math.tanh %202 : vector<8x128xf32>
    %209 = arith.select %2, %207, %208 : vector<8x128xi1>, vector<8x128xf32>
    %210 = vector.extract_strided_slice %209 {offsets = [0, 0], sizes = [8, 32], strides = [1, 1]} : vector<8x128xf32> to vector<8x32xf32>
    %211 = vector.extract_strided_slice %209 {offsets = [0, 32], sizes = [8, 32], strides = [1, 1]} : vector<8x128xf32> to vector<8x32xf32>
    %212 = vector.extract_strided_slice %209 {offsets = [0, 64], sizes = [8, 32], strides = [1, 1]} : vector<8x128xf32> to vector<8x32xf32>
    %213 = vector.extract_strided_slice %209 {offsets = [0, 96], sizes = [8, 32], strides = [1, 1]} : vector<8x128xf32> to vector<8x32xf32>
    %214 = arith.mulf %211, %196 : vector<8x32xf32>
    %215 = arith.mulf %210, %213 : vector<8x32xf32>
    %216 = arith.addf %214, %215 : vector<8x32xf32>
    %217 = math.tanh %216 : vector<8x32xf32>
    %218 = arith.mulf %212, %217 : vector<8x32xf32>
    %219 = vector.extract_strided_slice %176 {offsets = [16, 0], sizes = [8, 128], strides = [1, 1]} : vector<64x128xf32> to vector<8x128xf32>
    %c0_54 = arith.constant 0 : index
    %c0_55 = arith.constant 0 : index
    %220 = vector.load %arg4[%c0_54, %c0_55] : memref<32x128xf32, #tpu.memory_space<vmem>>, vector<32x128xf32>
    %cst_56 = arith.constant dense<0.000000e+00> : vector<8x128xf32>
    %221 = tpu.matmul %218, %220, %cst_56 {dimension_numbers = #tpu.dot_dimension_numbers<[1], [0], [0], [1], [0, 0, 1, 1], [], []>} : vector<8x32xf32>, vector<32x128xf32>, vector<8x128xf32> -> vector<8x128xf32>
    %222 = arith.addf %219, %221 : vector<8x128xf32>
    %223 = arith.negf %222 : vector<8x128xf32>
    %224 = math.exp %223 : vector<8x128xf32>
    %cst_57 = arith.constant 1.000000e+00 : f32
    %225 = vector.broadcast %cst_57 : f32 to vector<8x128xf32>
    %226 = arith.addf %225, %224 : vector<8x128xf32>
    %227 = arith.divf %225, %226 : vector<8x128xf32>
    %228 = math.tanh %222 : vector<8x128xf32>
    %229 = arith.select %2, %227, %228 : vector<8x128xi1>, vector<8x128xf32>
    %230 = vector.extract_strided_slice %229 {offsets = [0, 0], sizes = [8, 32], strides = [1, 1]} : vector<8x128xf32> to vector<8x32xf32>
    %231 = vector.extract_strided_slice %229 {offsets = [0, 32], sizes = [8, 32], strides = [1, 1]} : vector<8x128xf32> to vector<8x32xf32>
    %232 = vector.extract_strided_slice %229 {offsets = [0, 64], sizes = [8, 32], strides = [1, 1]} : vector<8x128xf32> to vector<8x32xf32>
    %233 = vector.extract_strided_slice %229 {offsets = [0, 96], sizes = [8, 32], strides = [1, 1]} : vector<8x128xf32> to vector<8x32xf32>
    %234 = arith.mulf %231, %216 : vector<8x32xf32>
    %235 = arith.mulf %230, %233 : vector<8x32xf32>
    %236 = arith.addf %234, %235 : vector<8x32xf32>
    %237 = math.tanh %236 : vector<8x32xf32>
    %238 = arith.mulf %232, %237 : vector<8x32xf32>
    %239 = vector.extract_strided_slice %176 {offsets = [24, 0], sizes = [8, 128], strides = [1, 1]} : vector<64x128xf32> to vector<8x128xf32>
    %c0_58 = arith.constant 0 : index
    %c0_59 = arith.constant 0 : index
    %240 = vector.load %arg4[%c0_58, %c0_59] : memref<32x128xf32, #tpu.memory_space<vmem>>, vector<32x128xf32>
    %cst_60 = arith.constant dense<0.000000e+00> : vector<8x128xf32>
    %241 = tpu.matmul %238, %240, %cst_60 {dimension_numbers = #tpu.dot_dimension_numbers<[1], [0], [0], [1], [0, 0, 1, 1], [], []>} : vector<8x32xf32>, vector<32x128xf32>, vector<8x128xf32> -> vector<8x128xf32>
    %242 = arith.addf %239, %241 : vector<8x128xf32>
    %243 = arith.negf %242 : vector<8x128xf32>
    %244 = math.exp %243 : vector<8x128xf32>
    %cst_61 = arith.constant 1.000000e+00 : f32
    %245 = vector.broadcast %cst_61 : f32 to vector<8x128xf32>
    %246 = arith.addf %245, %244 : vector<8x128xf32>
    %247 = arith.divf %245, %246 : vector<8x128xf32>
    %248 = math.tanh %242 : vector<8x128xf32>
    %249 = arith.select %2, %247, %248 : vector<8x128xi1>, vector<8x128xf32>
    %250 = vector.extract_strided_slice %249 {offsets = [0, 0], sizes = [8, 32], strides = [1, 1]} : vector<8x128xf32> to vector<8x32xf32>
    %251 = vector.extract_strided_slice %249 {offsets = [0, 32], sizes = [8, 32], strides = [1, 1]} : vector<8x128xf32> to vector<8x32xf32>
    %252 = vector.extract_strided_slice %249 {offsets = [0, 64], sizes = [8, 32], strides = [1, 1]} : vector<8x128xf32> to vector<8x32xf32>
    %253 = vector.extract_strided_slice %249 {offsets = [0, 96], sizes = [8, 32], strides = [1, 1]} : vector<8x128xf32> to vector<8x32xf32>
    %254 = arith.mulf %251, %236 : vector<8x32xf32>
    %255 = arith.mulf %250, %253 : vector<8x32xf32>
    %256 = arith.addf %254, %255 : vector<8x32xf32>
    %257 = math.tanh %256 : vector<8x32xf32>
    %258 = arith.mulf %252, %257 : vector<8x32xf32>
    %259 = vector.extract_strided_slice %176 {offsets = [32, 0], sizes = [8, 128], strides = [1, 1]} : vector<64x128xf32> to vector<8x128xf32>
    %c0_62 = arith.constant 0 : index
    %c0_63 = arith.constant 0 : index
    %260 = vector.load %arg4[%c0_62, %c0_63] : memref<32x128xf32, #tpu.memory_space<vmem>>, vector<32x128xf32>
    %cst_64 = arith.constant dense<0.000000e+00> : vector<8x128xf32>
    %261 = tpu.matmul %258, %260, %cst_64 {dimension_numbers = #tpu.dot_dimension_numbers<[1], [0], [0], [1], [0, 0, 1, 1], [], []>} : vector<8x32xf32>, vector<32x128xf32>, vector<8x128xf32> -> vector<8x128xf32>
    %262 = arith.addf %259, %261 : vector<8x128xf32>
    %263 = arith.negf %262 : vector<8x128xf32>
    %264 = math.exp %263 : vector<8x128xf32>
    %cst_65 = arith.constant 1.000000e+00 : f32
    %265 = vector.broadcast %cst_65 : f32 to vector<8x128xf32>
    %266 = arith.addf %265, %264 : vector<8x128xf32>
    %267 = arith.divf %265, %266 : vector<8x128xf32>
    %268 = math.tanh %262 : vector<8x128xf32>
    %269 = arith.select %2, %267, %268 : vector<8x128xi1>, vector<8x128xf32>
    %270 = vector.extract_strided_slice %269 {offsets = [0, 0], sizes = [8, 32], strides = [1, 1]} : vector<8x128xf32> to vector<8x32xf32>
    %271 = vector.extract_strided_slice %269 {offsets = [0, 32], sizes = [8, 32], strides = [1, 1]} : vector<8x128xf32> to vector<8x32xf32>
    %272 = vector.extract_strided_slice %269 {offsets = [0, 64], sizes = [8, 32], strides = [1, 1]} : vector<8x128xf32> to vector<8x32xf32>
    %273 = vector.extract_strided_slice %269 {offsets = [0, 96], sizes = [8, 32], strides = [1, 1]} : vector<8x128xf32> to vector<8x32xf32>
    %274 = arith.mulf %271, %256 : vector<8x32xf32>
    %275 = arith.mulf %270, %273 : vector<8x32xf32>
    %276 = arith.addf %274, %275 : vector<8x32xf32>
    %277 = math.tanh %276 : vector<8x32xf32>
    %278 = arith.mulf %272, %277 : vector<8x32xf32>
    %279 = vector.extract_strided_slice %176 {offsets = [40, 0], sizes = [8, 128], strides = [1, 1]} : vector<64x128xf32> to vector<8x128xf32>
    %c0_66 = arith.constant 0 : index
    %c0_67 = arith.constant 0 : index
    %280 = vector.load %arg4[%c0_66, %c0_67] : memref<32x128xf32, #tpu.memory_space<vmem>>, vector<32x128xf32>
    %cst_68 = arith.constant dense<0.000000e+00> : vector<8x128xf32>
    %281 = tpu.matmul %278, %280, %cst_68 {dimension_numbers = #tpu.dot_dimension_numbers<[1], [0], [0], [1], [0, 0, 1, 1], [], []>} : vector<8x32xf32>, vector<32x128xf32>, vector<8x128xf32> -> vector<8x128xf32>
    %282 = arith.addf %279, %281 : vector<8x128xf32>
    %283 = arith.negf %282 : vector<8x128xf32>
    %284 = math.exp %283 : vector<8x128xf32>
    %cst_69 = arith.constant 1.000000e+00 : f32
    %285 = vector.broadcast %cst_69 : f32 to vector<8x128xf32>
    %286 = arith.addf %285, %284 : vector<8x128xf32>
    %287 = arith.divf %285, %286 : vector<8x128xf32>
    %288 = math.tanh %282 : vector<8x128xf32>
    %289 = arith.select %2, %287, %288 : vector<8x128xi1>, vector<8x128xf32>
    %290 = vector.extract_strided_slice %289 {offsets = [0, 0], sizes = [8, 32], strides = [1, 1]} : vector<8x128xf32> to vector<8x32xf32>
    %291 = vector.extract_strided_slice %289 {offsets = [0, 32], sizes = [8, 32], strides = [1, 1]} : vector<8x128xf32> to vector<8x32xf32>
    %292 = vector.extract_strided_slice %289 {offsets = [0, 64], sizes = [8, 32], strides = [1, 1]} : vector<8x128xf32> to vector<8x32xf32>
    %293 = vector.extract_strided_slice %289 {offsets = [0, 96], sizes = [8, 32], strides = [1, 1]} : vector<8x128xf32> to vector<8x32xf32>
    %294 = arith.mulf %291, %276 : vector<8x32xf32>
    %295 = arith.mulf %290, %293 : vector<8x32xf32>
    %296 = arith.addf %294, %295 : vector<8x32xf32>
    %297 = math.tanh %296 : vector<8x32xf32>
    %298 = arith.mulf %292, %297 : vector<8x32xf32>
    %299 = vector.extract_strided_slice %176 {offsets = [48, 0], sizes = [8, 128], strides = [1, 1]} : vector<64x128xf32> to vector<8x128xf32>
    %c0_70 = arith.constant 0 : index
    %c0_71 = arith.constant 0 : index
    %300 = vector.load %arg4[%c0_70, %c0_71] : memref<32x128xf32, #tpu.memory_space<vmem>>, vector<32x128xf32>
    %cst_72 = arith.constant dense<0.000000e+00> : vector<8x128xf32>
    %301 = tpu.matmul %298, %300, %cst_72 {dimension_numbers = #tpu.dot_dimension_numbers<[1], [0], [0], [1], [0, 0, 1, 1], [], []>} : vector<8x32xf32>, vector<32x128xf32>, vector<8x128xf32> -> vector<8x128xf32>
    %302 = arith.addf %299, %301 : vector<8x128xf32>
    %303 = arith.negf %302 : vector<8x128xf32>
    %304 = math.exp %303 : vector<8x128xf32>
    %cst_73 = arith.constant 1.000000e+00 : f32
    %305 = vector.broadcast %cst_73 : f32 to vector<8x128xf32>
    %306 = arith.addf %305, %304 : vector<8x128xf32>
    %307 = arith.divf %305, %306 : vector<8x128xf32>
    %308 = math.tanh %302 : vector<8x128xf32>
    %309 = arith.select %2, %307, %308 : vector<8x128xi1>, vector<8x128xf32>
    %310 = vector.extract_strided_slice %309 {offsets = [0, 0], sizes = [8, 32], strides = [1, 1]} : vector<8x128xf32> to vector<8x32xf32>
    %311 = vector.extract_strided_slice %309 {offsets = [0, 32], sizes = [8, 32], strides = [1, 1]} : vector<8x128xf32> to vector<8x32xf32>
    %312 = vector.extract_strided_slice %309 {offsets = [0, 64], sizes = [8, 32], strides = [1, 1]} : vector<8x128xf32> to vector<8x32xf32>
    %313 = vector.extract_strided_slice %309 {offsets = [0, 96], sizes = [8, 32], strides = [1, 1]} : vector<8x128xf32> to vector<8x32xf32>
    %314 = arith.mulf %311, %296 : vector<8x32xf32>
    %315 = arith.mulf %310, %313 : vector<8x32xf32>
    %316 = arith.addf %314, %315 : vector<8x32xf32>
    %317 = math.tanh %316 : vector<8x32xf32>
    %318 = arith.mulf %312, %317 : vector<8x32xf32>
    %319 = vector.extract_strided_slice %176 {offsets = [56, 0], sizes = [8, 128], strides = [1, 1]} : vector<64x128xf32> to vector<8x128xf32>
    %c0_74 = arith.constant 0 : index
    %c0_75 = arith.constant 0 : index
    %320 = vector.load %arg4[%c0_74, %c0_75] : memref<32x128xf32, #tpu.memory_space<vmem>>, vector<32x128xf32>
    %cst_76 = arith.constant dense<0.000000e+00> : vector<8x128xf32>
    %321 = tpu.matmul %318, %320, %cst_76 {dimension_numbers = #tpu.dot_dimension_numbers<[1], [0], [0], [1], [0, 0, 1, 1], [], []>} : vector<8x32xf32>, vector<32x128xf32>, vector<8x128xf32> -> vector<8x128xf32>
    %322 = arith.addf %319, %321 : vector<8x128xf32>
    %323 = arith.negf %322 : vector<8x128xf32>
    %324 = math.exp %323 : vector<8x128xf32>
    %cst_77 = arith.constant 1.000000e+00 : f32
    %325 = vector.broadcast %cst_77 : f32 to vector<8x128xf32>
    %326 = arith.addf %325, %324 : vector<8x128xf32>
    %327 = arith.divf %325, %326 : vector<8x128xf32>
    %328 = math.tanh %322 : vector<8x128xf32>
    %329 = arith.select %2, %327, %328 : vector<8x128xi1>, vector<8x128xf32>
    %330 = vector.extract_strided_slice %329 {offsets = [0, 0], sizes = [8, 32], strides = [1, 1]} : vector<8x128xf32> to vector<8x32xf32>
    %331 = vector.extract_strided_slice %329 {offsets = [0, 32], sizes = [8, 32], strides = [1, 1]} : vector<8x128xf32> to vector<8x32xf32>
    %332 = vector.extract_strided_slice %329 {offsets = [0, 64], sizes = [8, 32], strides = [1, 1]} : vector<8x128xf32> to vector<8x32xf32>
    %333 = vector.extract_strided_slice %329 {offsets = [0, 96], sizes = [8, 32], strides = [1, 1]} : vector<8x128xf32> to vector<8x32xf32>
    %334 = arith.mulf %331, %316 : vector<8x32xf32>
    %335 = arith.mulf %330, %333 : vector<8x32xf32>
    %336 = arith.addf %334, %335 : vector<8x32xf32>
    %337 = math.tanh %336 : vector<8x32xf32>
    %338 = arith.mulf %332, %337 : vector<8x32xf32>
    %339 = tpu.concatenate %198, %218, %238, %258, %278, %298, %318, %338 in 1 : vector<8x32xf32>, vector<8x32xf32>, vector<8x32xf32>, vector<8x32xf32>, vector<8x32xf32>, vector<8x32xf32>, vector<8x32xf32>, vector<8x32xf32> -> vector<8x256xf32>
    %c0_78 = arith.constant 0 : index
    %c0_79 = arith.constant 0 : index
    %340 = vector.load %arg7[%c0_78, %c0_79] : memref<256x128xf32, #tpu.memory_space<vmem>>, vector<256x128xf32>
    %cst_80 = arith.constant dense<0.000000e+00> : vector<8x128xf32>
    %341 = tpu.matmul %339, %340, %cst_80 {dimension_numbers = #tpu.dot_dimension_numbers<[1], [0], [0], [1], [0, 0, 1, 1], [], []>} : vector<8x256xf32>, vector<256x128xf32>, vector<8x128xf32> -> vector<8x128xf32>
    %c0_81 = arith.constant 0 : index
    %c0_82 = arith.constant 0 : index
    %342 = vector.load %arg8[%c0_81, %c0_82] : memref<1x128xf32, #tpu.memory_space<vmem>>, vector<1x128xf32>
    %343 = vector.broadcast %342 : vector<1x128xf32> to vector<8x128xf32>
    %344 = arith.addf %341, %343 : vector<8x128xf32>
    %345 = math.tanh %344 : vector<8x128xf32>
    %c0_83 = arith.constant 0 : index
    %c0_84 = arith.constant 0 : index
    %346 = vector.load %arg9[%c0_83, %c0_84] : memref<128x128xf32, #tpu.memory_space<vmem>>, vector<128x128xf32>
    %cst_85 = arith.constant dense<0.000000e+00> : vector<8x128xf32>
    %347 = tpu.matmul %345, %346, %cst_85 {dimension_numbers = #tpu.dot_dimension_numbers<[1], [0], [0], [1], [0, 0, 1, 1], [], []>} : vector<8x128xf32>, vector<128x128xf32>, vector<8x128xf32> -> vector<8x128xf32>
    %c0_86 = arith.constant 0 : index
    %c0_87 = arith.constant 0 : index
    %348 = vector.load %arg10[%c0_86, %c0_87] : memref<1x128xf32, #tpu.memory_space<vmem>>, vector<1x128xf32>
    %349 = vector.broadcast %348 : vector<1x128xf32> to vector<8x128xf32>
    %350 = arith.addf %347, %349 : vector<8x128xf32>
    %c0_88 = arith.constant 0 : index
    %c0_89 = arith.constant 0 : index
    %351 = vector.load %arg11[%c0_88, %c0_89] : memref<8x128xf32, #tpu.memory_space<vmem>>, vector<8x128xf32>
    tpu.vector_store %arg11[%c0_88, %c0_89], %350 {strides = array<i32>} : memref<8x128xf32, #tpu.memory_space<vmem>>, vector<8x128xf32>,
    return
  }
}

</mosaic_0001>

<llo_original>
// kernel: tpu_custom_call.1
$region0: #{tpu_custom_call.1}
  #allocation0 [shape = 'u32[]', space=smem, size = 0x4, offset = 0x4, fixed_abs, tag = 'smem constant byte address 0x4 - core index']
  #allocation1 [shape = 'u32[144,128]{1,0:T(1,128)}', space=vmem, size = 0x12000, scoped, tag = 'internal scratch']
  %s0 = inlined_call_operand.hbm [shape: f32[64,128], index: 0, kind: input, shape index: {}]
  %s1 = inlined_call_operand.hbm [shape: f32[128,128], index: 1, kind: input, shape index: {}]
  %s2 = inlined_call_operand.hbm [shape: f32[32,128], index: 2, kind: input, shape index: {}]
  %s3 = inlined_call_operand.hbm [shape: f32[32,128], index: 3, kind: input, shape index: {}]
  %s4 = inlined_call_operand.hbm [shape: f32[32,128], index: 4, kind: input, shape index: {}]
  %s5 = inlined_call_operand.vmem [shape: f32[1,128], index: 5, kind: input, shape index: {}]
  %s6 = inlined_call_operand.vmem [shape: f32[1,128], index: 6, kind: input, shape index: {}]
  %s7 = inlined_call_operand.hbm [shape: f32[256,128], index: 7, kind: input, shape index: {}]
  %s8 = inlined_call_operand.vmem [shape: f32[1,128], index: 8, kind: input, shape index: {}]
  %s9 = inlined_call_operand.hbm [shape: f32[128,128], index: 9, kind: input, shape index: {}]
  %s10 = inlined_call_operand.vmem [shape: f32[1,128], index: 10, kind: input, shape index: {}]
  %s11 = inlined_call_operand.hbm [shape: f32[8,128], index: 11, kind: output, shape index: {}]
  %s12 = sld [smem:[#allocation0]]
  $region82: #{tpu_custom_call.1} parent=0
    _
  %s14 = ssub.s32 1, %s12
  %s15 = scalar_select 0, %s14, %s12
  $region1: #{tpu_custom_call.1} parent=0
    #allocation2 [shape = 'u8[32768]{0}', space=vmem, size = 0x8000, scoped, tag = 'input window, operand 0, single buffered']
    #allocation3 [shape = 's32[1]{0}', space=sflag, size = 0x4, scoped, tag = 'scoped memory for tpu_custom_call.1']
    #allocation4 [shape = 's32[1]{0}', space=sflag, size = 0x4, scoped, tag = 'scoped memory for tpu_custom_call.1']
    #allocation5 [shape = 'u8[65536]{0}', space=vmem, size = 0x10000, scoped, tag = 'input window, operand 1, single buffered']
    #allocation6 [shape = 's32[1]{0}', space=sflag, size = 0x4, scoped, tag = 'scoped memory for tpu_custom_call.1']
    #allocation7 [shape = 'u8[16384]{0}', space=vmem, size = 0x4000, scoped, tag = 'input window, operand 2, single buffered']
    #allocation8 [shape = 'u8[16384]{0}', space=vmem, size = 0x4000, scoped, tag = 'input window, operand 3, single buffered']
    #allocation9 [shape = 's32[1]{0}', space=sflag, size = 0x4, scoped, tag = 'scoped memory for tpu_custom_call.1']
    #allocation10 [shape = 'u8[16384]{0}', space=vmem, size = 0x4000, scoped, tag = 'input window, operand 4, single buffered']
    #allocation11 [shape = 'u8[131072]{0}', space=vmem, size = 0x20000, scoped, tag = 'input window, operand 7, single buffered']
    #allocation12 [shape = 's32[1]{0}', space=sflag, size = 0x4, scoped, tag = 'scoped memory for tpu_custom_call.1']
    #allocation13 [shape = 'u8[65536]{0}', space=vmem, size = 0x10000, scoped, tag = 'input window, operand 9, single buffered']
    #allocation14 [shape = 'u8[4096]{0}', space=vmem, size = 0x1000, scoped, tag = 'output window, operand 0, single buffered']
    %16 = vsyncpa [#allocation3], 0
    %17 = vsyncpa [#allocation6], 0
    %18 = vsyncpa [#allocation9], 0
    %19 = vsyncpa [#allocation12], 0
    %20 = vsyncpa [#allocation4], 0
    // Predicated region
    $region2: #{tpu_custom_call.1} parent=1 // pred_check
      _
    $region3: #{tpu_custom_call.1} parent=1 // pred_check_branch
      %22 = sbr.rel (0) target = $region5
    $region4: #{tpu_custom_call.1} parent=1 // pred_region
      %s24 = ssub.s32 1024, 1024
      %25 = vsyncadd [#allocation3], %s24
      %s26 = sshll.u32 [#allocation2], 4
      %s27 = int_to_ptr.vmem [resolvable:$true] %s26
      %32 = dma.hbm_to_vmem [thread:$0]  %s0, 1024, %s27, [#allocation3], 128, 128, 8
    $region5: #{tpu_custom_call.1} parent=1 // pred_fallthru
      _
    // Predicated region
    $region6: #{tpu_custom_call.1} parent=1 // pred_check
      _
    $region7: #{tpu_custom_call.1} parent=1 // pred_check_branch
      %34 = sbr.rel (0) target = $region9
    $region8: #{tpu_custom_call.1} parent=1 // pred_region
      %s36 = ssub.s32 2048, 2048
      %37 = vsyncadd [#allocation6], %s36
      %s38 = sshll.u32 [#allocation5], 4
      %s39 = int_to_ptr.vmem [resolvable:$true] %s38
      %44 = dma.hbm_to_vmem [thread:$0]  %s1, 2048, %s39, [#allocation6], 128, 128, 8
    $region9: #{tpu_custom_call.1} parent=1 // pred_fallthru
      _
    // Predicated region
    $region10: #{tpu_custom_call.1} parent=1 // pred_check
      _
    $region11: #{tpu_custom_call.1} parent=1 // pred_check_branch
      %46 = sbr.rel (0) target = $region13
    $region12: #{tpu_custom_call.1} parent=1 // pred_region
      %s48 = ssub.s32 512, 512
      %49 = vsyncadd [#allocation6], %s48
      %s50 = sshll.u32 [#allocation7], 4
      %s51 = int_to_ptr.vmem [resolvable:$true] %s50
      %56 = dma.hbm_to_vmem [thread:$0]  %s2, 512, %s51, [#allocation6], 128, 128, 8
    $region13: #{tpu_custom_call.1} parent=1 // pred_fallthru
      _
    // Predicated region
    $region14: #{tpu_custom_call.1} parent=1 // pred_check
      _
    $region15: #{tpu_custom_call.1} parent=1 // pred_check_branch
      %58 = sbr.rel (0) target = $region17
    $region16: #{tpu_custom_call.1} parent=1 // pred_region
      %s60 = ssub.s32 512, 512
      %61 = vsyncadd [#allocation9], %s60
      %s62 = sshll.u32 [#allocation8], 4
      %s63 = int_to_ptr.vmem [resolvable:$true] %s62
      %68 = dma.hbm_to_vmem [thread:$0]  %s3, 512, %s63, [#allocation9], 128, 128, 8
    $region17: #{tpu_custom_call.1} parent=1 // pred_fallthru
      _
    // Predicated region
    $region18: #{tpu_custom_call.1} parent=1 // pred_check
      _
    $region19: #{tpu_custom_call.1} parent=1 // pred_check_branch
      %70 = sbr.rel (0) target = $region21
    $region20: #{tpu_custom_call.1} parent=1 // pred_region
      %s72 = ssub.s32 512, 512
      %73 = vsyncadd [#allocation9], %s72
      %s74 = sshll.u32 [#allocation10], 4
      %s75 = int_to_ptr.vmem [resolvable:$true] %s74
      %80 = dma.hbm_to_vmem [thread:$0]  %s4, 512, %s75, [#allocation9], 128, 128, 8
    $region21: #{tpu_custom_call.1} parent=1 // pred_fallthru
      _
    // Predicated region
    $region22: #{tpu_custom_call.1} parent=1 // pred_check
      _
    $region23: #{tpu_custom_call.1} parent=1 // pred_check_branch
      %82 = sbr.rel (0) target = $region25
    $region24: #{tpu_custom_call.1} parent=1 // pred_region
      _
    $region25: #{tpu_custom_call.1} parent=1 // pred_fallthru
      _
    // Predicated region
    $region26: #{tpu_custom_call.1} parent=1 // pred_check
      _
    $region27: #{tpu_custom_call.1} parent=1 // pred_check_branch
      %84 = sbr.rel (0) target = $region29
    $region28: #{tpu_custom_call.1} parent=1 // pred_region
      _
    $region29: #{tpu_custom_call.1} parent=1 // pred_fallthru
      _
    // Predicated region
    $region30: #{tpu_custom_call.1} parent=1 // pred_check
      _
    $region31: #{tpu_custom_call.1} parent=1 // pred_check_branch
      %86 = sbr.rel (0) target = $region33
    $region32: #{tpu_custom_call.1} parent=1 // pred_region
      %s88 = ssub.s32 4096, 4096
      %89 = vsyncadd [#allocation12], %s88
      %s90 = sshll.u32 [#allocation11], 4
      %s91 = int_to_ptr.vmem [resolvable:$true] %s90
      %96 = dma.hbm_to_vmem [thread:$0]  %s7, 4096, %s91, [#allocation12], 128, 128, 8
    $region33: #{tpu_custom_call.1} parent=1 // pred_fallthru
      _
    // Predicated region
    $region34: #{tpu_custom_call.1} parent=1 // pred_check
      _
    $region35: #{tpu_custom_call.1} parent=1 // pred_check_branch
      %98 = sbr.rel (0) target = $region37
    $region36: #{tpu_custom_call.1} parent=1 // pred_region
      _
    $region37: #{tpu_custom_call.1} parent=1 // pred_fallthru
      _
    // Predicated region
    $region38: #{tpu_custom_call.1} parent=1 // pred_check
      _
    $region39: #{tpu_custom_call.1} parent=1 // pred_check_branch
      %100 = sbr.rel (0) target = $region41
    $region40: #{tpu_custom_call.1} parent=1 // pred_region
      %s102 = ssub.s32 2048, 2048
      %103 = vsyncadd [#allocation12], %s102
      %s104 = sshll.u32 [#allocation13], 4
      %s105 = int_to_ptr.vmem [resolvable:$true] %s104
      %110 = dma.hbm_to_vmem [thread:$0]  %s9, 2048, %s105, [#allocation12], 128, 128, 8
    $region41: #{tpu_custom_call.1} parent=1 // pred_fallthru
      _
    // Predicated region
    $region42: #{tpu_custom_call.1} parent=1 // pred_check
      _
    $region43: #{tpu_custom_call.1} parent=1 // pred_check_branch
      %112 = sbr.rel (0) target = $region45
    $region44: #{tpu_custom_call.1} parent=1 // pred_region
      _
    $region45: #{tpu_custom_call.1} parent=1 // pred_fallthru
      _
    // Predicated region
    $region46: #{tpu_custom_call.1} parent=1 // pred_check
      _
    $region47: #{tpu_custom_call.1} parent=1 // pred_check_branch
      %114 = sbr.rel (0) target = $region49
    $region48: #{tpu_custom_call.1} parent=1 // pred_region
      %115 = dma.done [#allocation3], 1024
    $region49: #{tpu_custom_call.1} parent=1 // pred_fallthru
      _
    // Predicated region
    $region50: #{tpu_custom_call.1} parent=1 // pred_check
      _
    $region51: #{tpu_custom_call.1} parent=1 // pred_check_branch
      %117 = sbr.rel (0) target = $region53
    $region52: #{tpu_custom_call.1} parent=1 // pred_region
      %118 = dma.done [#allocation6], 2048
    $region53: #{tpu_custom_call.1} parent=1 // pred_fallthru
      _
    // Predicated region
    $region54: #{tpu_custom_call.1} parent=1 // pred_check
      _
    $region55: #{tpu_custom_call.1} parent=1 // pred_check_branch
      %120 = sbr.rel (0) target = $region57
    $region56: #{tpu_custom_call.1} parent=1 // pred_region
      %121 = dma.done [#allocation6], 512
    $region57: #{tpu_custom_call.1} parent=1 // pred_fallthru
      _
    // Predicated region
    $region58: #{tpu_custom_call.1} parent=1 // pred_check
      _
    $region59: #{tpu_custom_call.1} parent=1 // pred_check_branch
      %123 = sbr.rel (0) target = $region61
    $region60: #{tpu_custom_call.1} parent=1 // pred_region
      %124 = dma.done [#allocation9], 512
    $region61: #{tpu_custom_call.1} parent=1 // pred_fallthru
      _
    // Predicated region
    $region62: #{tpu_custom_call.1} parent=1 // pred_check
      _
    $region63: #{tpu_custom_call.1} parent=1 // pred_check_branch
      %126 = sbr.rel (0) target = $region65
    $region64: #{tpu_custom_call.1} parent=1 // pred_region
      %127 = dma.done [#allocation9], 512
    $region65: #{tpu_custom_call.1} parent=1 // pred_fallthru
      _
    // Predicated region
    $region66: #{tpu_custom_call.1} parent=1 // pred_check
      _
    $region67: #{tpu_custom_call.1} parent=1 // pred_check_branch
      %129 = sbr.rel (0) target = $region69
    $region68: #{tpu_custom_call.1} parent=1 // pred_region
      %130 = dma.done [#allocation12], 4096
    $region69: #{tpu_custom_call.1} parent=1 // pred_fallthru
      _
    // Predicated region
    $region70: #{tpu_custom_call.1} parent=1 // pred_check
      _
    $region71: #{tpu_custom_call.1} parent=1 // pred_check_branch
      %132 = sbr.rel (0) target = $region73
    $region72: #{tpu_custom_call.1} parent=1 // pred_region
      %133 = dma.done [#allocation12], 2048
    $region73: #{tpu_custom_call.1} parent=1 // pred_fallthru
      _
    %v134 = vlaneseq
    %v135 = vand.u32 %v134, 127
    %vm136 = vcmp.lt.s32.totalorder %v135, 96
    %v137 = vld [vmem:[#allocation2] sm:$0xff]
    %v138 = vld [vmem:[#allocation2 + $0x8] sm:$0xff]
    %v139 = vld [vmem:[#allocation2 + $0x10] sm:$0xff]
    %v140 = vld [vmem:[#allocation2 + $0x18] sm:$0xff]
    %v141 = vld [vmem:[#allocation2 + $0x20] sm:$0xff]
    %v142 = vld [vmem:[#allocation2 + $0x28] sm:$0xff]
    %v143 = vld [vmem:[#allocation2 + $0x30] sm:$0xff]
    %v144 = vld [vmem:[#allocation2 + $0x38] sm:$0xff]
    %v145 = vld [vmem:[#allocation5] sm:$0xff]
    %v146 = vld [vmem:[#allocation5 + $0x8] sm:$0xff]
    %v147 = vld [vmem:[#allocation5 + $0x10] sm:$0xff]
    %v148 = vld [vmem:[#allocation5 + $0x18] sm:$0xff]
    %v149 = vld [vmem:[#allocation5 + $0x20] sm:$0xff]
    %v150 = vld [vmem:[#allocation5 + $0x28] sm:$0xff]
    %v151 = vld [vmem:[#allocation5 + $0x30] sm:$0xff]
    %v152 = vld [vmem:[#allocation5 + $0x38] sm:$0xff]
    %v153 = vld [vmem:[#allocation5 + $0x40] sm:$0xff]
    %v154 = vld [vmem:[#allocation5 + $0x48] sm:$0xff]
    %v155 = vld [vmem:[#allocation5 + $0x50] sm:$0xff]
    %v156 = vld [vmem:[#allocation5 + $0x58] sm:$0xff]
    %v157 = vld [vmem:[#allocation5 + $0x60] sm:$0xff]
    %v158 = vld [vmem:[#allocation5 + $0x68] sm:$0xff]
    %v159 = vld [vmem:[#allocation5 + $0x70] sm:$0xff]
    %v160 = vld [vmem:[#allocation5 + $0x78] sm:$0xff]
    %v161 = vld [vmem:[%s5] sm:$0x1]
    %v163 = vlaneseq
    %v164 = vshrl.u32 %v163, 7
    %v165 = vsub.s32 0, %v164
    %v166 = vrot.slane %v161, %v165
    %168 = vmatprep.subr.mxu0 0.0
    %169 = vmatpush1.msra.mxu0 %v145
    %170 = vmatprep.subr.mxu0 0.0
    %171 = vmatpush1.msra.mxu0 %v146
    %172 = vmatprep.subr.mxu0 0.0
    %173 = vmatpush1.msra.mxu0 %v147
    %174 = vmatprep.subr.mxu0 0.0
    %175 = vmatpush1.msra.mxu0 %v148
    %176 = vmatprep.subr.mxu0 0.0
    %177 = vmatpush1.msra.mxu0 %v149
    %178 = vmatprep.subr.mxu0 0.0
    %179 = vmatpush1.msra.mxu0 %v150
    %180 = vmatprep.subr.mxu0 0.0
    %181 = vmatpush1.msra.mxu0 %v151
    %182 = vmatprep.subr.mxu0 0.0
    %183 = vmatpush1.msra.mxu0 %v152
    %184 = vmatprep.subr.mxu0 0.0
    %185 = vmatpush1.msra.mxu0 %v153
    %186 = vmatprep.subr.mxu0 0.0
    %187 = vmatpush1.msra.mxu0 %v154
    %188 = vmatprep.subr.mxu0 0.0
    %189 = vmatpush1.msra.mxu0 %v155
    %190 = vmatprep.subr.mxu0 0.0
    %191 = vmatpush1.msra.mxu0 %v156
    %192 = vmatprep.subr.mxu0 0.0
    %193 = vmatpush1.msra.mxu0 %v157
    %194 = vmatprep.subr.mxu0 0.0
    %195 = vmatpush1.msra.mxu0 %v158
    %196 = vmatprep.subr.mxu0 0.0
    %197 = vmatpush1.msra.mxu0 %v159
    %198 = vmatprep.subr.mxu0 0.0
    %199 = vmatpush1.msra.mxu0 %v160
    %200 = vmatprep.subr.mxu0 0.0
    %201 = vmatpush1.msra.mxu0 0.0
    %202 = vmatprep.subr.mxu0 0.0
    %203 = vmatpush1.msra.mxu0 0.0
    %204 = vmatprep.subr.mxu0 0.0
    %205 = vmatpush1.msra.mxu0 0.0
    %206 = vmatprep.subr.mxu0 0.0
    %207 = vmatpush1.msra.mxu0 0.0
    %208 = vmatprep.subr.mxu0 0.0
    %209 = vmatpush1.msra.mxu0 0.0
    %210 = vmatprep.subr.mxu0 0.0
    %211 = vmatpush1.msra.mxu0 0.0
    %212 = vmatprep.subr.mxu0 0.0
    %213 = vmatpush1.msra.mxu0 0.0
    %214 = vmatprep.subr.mxu0 0.0
    %215 = vmatpush1.msra.mxu0 0.0
    %216 = vmatprep.subr.mxu0 0.0
    %217 = vmatpush1.msra.mxu0 0.0
    %218 = vmatprep.subr.mxu0 0.0
    %219 = vmatpush1.msra.mxu0 0.0
    %220 = vmatprep.subr.mxu0 0.0
    %221 = vmatpush1.msra.mxu0 0.0
    %222 = vmatprep.subr.mxu0 0.0
    %223 = vmatpush1.msra.mxu0 0.0
    %224 = vmatprep.subr.mxu0 0.0
    %225 = vmatpush1.msra.mxu0 0.0
    %226 = vmatprep.subr.mxu0 0.0
    %227 = vmatpush1.msra.mxu0 0.0
    %228 = vmatprep.subr.mxu0 0.0
    %229 = vmatpush1.msra.mxu0 0.0
    %230 = vmatprep.subr.mxu0 0.0
    %231 = vmatpush1.msra.mxu0 0.0
    %232 = vmatprep.mubr.f32.mxu0 0.0
    %233 = vmatmul.mubr.f32.gmra.mrb[0].mxu0 %v137
    %v234 = vpop.f32.mrb[0].mxu0
    %v235 = vadd.f32 %v166, %v234
    %v236 = vpop.f32.mrb[0].mxu0
    %237 = vmatprep.mubr.f32.mxu0 0.0
    %238 = vmatmul.mubr.f32.gmra.mrb[0].mxu0 %v138
    %v239 = vpop.f32.mrb[0].mxu0
    %v240 = vadd.f32 %v166, %v239
    %v241 = vpop.f32.mrb[0].mxu0
    %242 = vmatprep.mubr.f32.mxu0 0.0
    %243 = vmatmul.mubr.f32.gmra.mrb[0].mxu0 %v139
    %v244 = vpop.f32.mrb[0].mxu0
    %v245 = vadd.f32 %v166, %v244
    %v246 = vpop.f32.mrb[0].mxu0
    %247 = vmatprep.mubr.f32.mxu0 0.0
    %248 = vmatmul.mubr.f32.gmra.mrb[0].mxu0 %v140
    %v249 = vpop.f32.mrb[0].mxu0
    %v250 = vadd.f32 %v166, %v249
    %v251 = vpop.f32.mrb[0].mxu0
    %252 = vmatprep.mubr.f32.mxu0 0.0
    %253 = vmatmul.mubr.f32.gmra.mrb[0].mxu0 %v141
    %v254 = vpop.f32.mrb[0].mxu0
    %v255 = vadd.f32 %v166, %v254
    %v256 = vpop.f32.mrb[0].mxu0
    %257 = vmatprep.mubr.f32.mxu0 0.0
    %258 = vmatmul.mubr.f32.gmra.mrb[0].mxu0 %v142
    %v259 = vpop.f32.mrb[0].mxu0
    %v260 = vadd.f32 %v166, %v259
    %v261 = vpop.f32.mrb[0].mxu0
    %262 = vmatprep.mubr.f32.mxu0 0.0
    %263 = vmatmul.mubr.f32.gmra.mrb[0].mxu0 %v143
    %v264 = vpop.f32.mrb[0].mxu0
    %v265 = vadd.f32 %v166, %v264
    %v266 = vpop.f32.mrb[0].mxu0
    %267 = vmatprep.mubr.f32.mxu0 0.0
    %268 = vmatmul.mubr.f32.gmra.mrb[0].mxu0 %v144
    %v269 = vpop.f32.mrb[0].mxu0
    %v270 = vadd.f32 %v166, %v269
    %v271 = vpop.f32.mrb[0].mxu0
    %272 = vdwg.mxu0
    %v273 = vld [vmem:[#allocation8] sm:$0xff]
    %v274 = vld [vmem:[#allocation8 + $0x8] sm:$0xff]
    %v275 = vld [vmem:[#allocation8 + $0x10] sm:$0xff]
    %v276 = vld [vmem:[#allocation8 + $0x18] sm:$0xff]
    %vm277 = vcmask 261120
    %v279 = vsel %vm277, 0.0, 0
    %281 = vmatprep.subr.mxu0 0.0
    %282 = vmatpush1.msra.mxu0 %v273
    %283 = vmatprep.subr.mxu0 0.0
    %284 = vmatpush1.msra.mxu0 %v274
    %285 = vmatprep.subr.mxu0 0.0
    %286 = vmatpush1.msra.mxu0 %v275
    %287 = vmatprep.subr.mxu0 0.0
    %288 = vmatpush1.msra.mxu0 %v276
    %289 = vmatprep.subr.mxu0 0.0
    %290 = vmatpush1.msra.mxu0 0.0
    %291 = vmatprep.subr.mxu0 0.0
    %292 = vmatpush1.msra.mxu0 0.0
    %293 = vmatprep.subr.mxu0 0.0
    %294 = vmatpush1.msra.mxu0 0.0
    %295 = vmatprep.subr.mxu0 0.0
    %296 = vmatpush1.msra.mxu0 0.0
    %297 = vmatprep.subr.mxu0 0.0
    %298 = vmatpush1.msra.mxu0 0.0
    %299 = vmatprep.subr.mxu0 0.0
    %300 = vmatpush1.msra.mxu0 0.0
    %301 = vmatprep.subr.mxu0 0.0
    %302 = vmatpush1.msra.mxu0 0.0
    %303 = vmatprep.subr.mxu0 0.0
    %304 = vmatpush1.msra.mxu0 0.0
    %305 = vmatprep.subr.mxu0 0.0
    %306 = vmatpush1.msra.mxu0 0.0
    %307 = vmatprep.subr.mxu0 0.0
    %308 = vmatpush1.msra.mxu0 0.0
    %309 = vmatprep.subr.mxu0 0.0
    %310 = vmatpush1.msra.mxu0 0.0
    %311 = vmatprep.subr.mxu0 0.0
    %312 = vmatpush1.msra.mxu0 0.0
    %313 = vmatprep.subr.mxu0 0.0
    %314 = vmatpush1.msra.mxu0 0.0
    %315 = vmatprep.subr.mxu0 0.0
    %316 = vmatpush1.msra.mxu0 0.0
    %317 = vmatprep.subr.mxu0 0.0
    %318 = vmatpush1.msra.mxu0 0.0
    %319 = vmatprep.subr.mxu0 0.0
    %320 = vmatpush1.msra.mxu0 0.0
    %321 = vmatprep.subr.mxu0 0.0
    %322 = vmatpush1.msra.mxu0 0.0
    %323 = vmatprep.subr.mxu0 0.0
    %324 = vmatpush1.msra.mxu0 0.0
    %325 = vmatprep.subr.mxu0 0.0
    %326 = vmatpush1.msra.mxu0 0.0
    %327 = vmatprep.subr.mxu0 0.0
    %328 = vmatpush1.msra.mxu0 0.0
    %329 = vmatprep.subr.mxu0 0.0
    %330 = vmatpush1.msra.mxu0 0.0
    %331 = vmatprep.subr.mxu0 0.0
    %332 = vmatpush1.msra.mxu0 0.0
    %333 = vmatprep.subr.mxu0 0.0
    %334 = vmatpush1.msra.mxu0 0.0
    %335 = vmatprep.subr.mxu0 0.0
    %336 = vmatpush1.msra.mxu0 0.0
    %337 = vmatprep.subr.mxu0 0.0
    %338 = vmatpush1.msra.mxu0 0.0
    %339 = vmatprep.subr.mxu0 0.0
    %340 = vmatpush1.msra.mxu0 0.0
    %341 = vmatprep.subr.mxu0 0.0
    %342 = vmatpush1.msra.mxu0 0.0
    %343 = vmatprep.subr.mxu0 0.0
    %344 = vmatpush1.msra.mxu0 0.0
    %345 = vmatprep.mubr.f32.mxu0 0.0
    %346 = vmatmul.mubr.f32.gmra.mrb[0].mxu0 %v279
    %v347 = vpop.f32.mrb[0].mxu0
    %v348 = vadd.f32 0.0, %v347
    %v349 = vpop.f32.mrb[0].mxu0
    %350 = vdwg.mxu0
    %v351 = vadd.f32 %v235, %v348
    %v352 = vxor.u32 %v351, 2147483648
    %v353 = vmul.f32 %v352, 1.442695
    %v354 = vpow.pop %v353
    %v355 = vadd.f32 %v354, 1.0
    %v356 = vrcp.pop %v355
    %v357 = vmul.f32 1.0, %v356
    %v358 = vtanh.pop %v351
    %v359 = vsel %vm136, %v357, %v358
    %v360 = vmul.f32 %v359, 0.0
    %362 = vrot.lane.b32.xlu0 %v359, 32
    %v363 = vpop.permute.xlu0 %362
    %v365 = vmul.f32 %v359, %v363
    %367 = vrot.lane.b32.xlu0 %v365, 32
    %v368 = vpop.permute.xlu0 %367
    %v370 = vadd.f32 %v360, %v368
    %v371 = vtanh.pop %v370
    %373 = vrot.lane.b32.xlu0 %v371, 32
    %v374 = vpop.permute.xlu0 %373
    %v376 = vmul.f32 %v359, %v374
    %378 = vrot.lane.b32.xlu0 %v376, 64
    %v379 = vpop.permute.xlu0 %378
    %v380 = vsel %vm277, %v379, 0
    %382 = vmatprep.subr.mxu0 0.0
    %383 = vmatpush1.msra.mxu0 %v273
    %384 = vmatprep.subr.mxu0 0.0
    %385 = vmatpush1.msra.mxu0 %v274
    %386 = vmatprep.subr.mxu0 0.0
    %387 = vmatpush1.msra.mxu0 %v275
    %388 = vmatprep.subr.mxu0 0.0
    %389 = vmatpush1.msra.mxu0 %v276
    %390 = vmatprep.subr.mxu0 0.0
    %391 = vmatpush1.msra.mxu0 0.0
    %392 = vmatprep.subr.mxu0 0.0
    %393 = vmatpush1.msra.mxu0 0.0
    %394 = vmatprep.subr.mxu0 0.0
    %395 = vmatpush1.msra.mxu0 0.0
    %396 = vmatprep.subr.mxu0 0.0
    %397 = vmatpush1.msra.mxu0 0.0
    %398 = vmatprep.subr.mxu0 0.0
    %399 = vmatpush1.msra.mxu0 0.0
    %400 = vmatprep.subr.mxu0 0.0
    %401 = vmatpush1.msra.mxu0 0.0
    %402 = vmatprep.subr.mxu0 0.0
    %403 = vmatpush1.msra.mxu0 0.0
    %404 = vmatprep.subr.mxu0 0.0
    %405 = vmatpush1.msra.mxu0 0.0
    %406 = vmatprep.subr.mxu0 0.0
    %407 = vmatpush1.msra.mxu0 0.0
    %408 = vmatprep.subr.mxu0 0.0
    %409 = vmatpush1.msra.mxu0 0.0
    %410 = vmatprep.subr.mxu0 0.0
    %411 = vmatpush1.msra.mxu0 0.0
    %412 = vmatprep.subr.mxu0 0.0
    %413 = vmatpush1.msra.mxu0 0.0
    %414 = vmatprep.subr.mxu0 0.0
    %415 = vmatpush1.msra.mxu0 0.0
    %416 = vmatprep.subr.mxu0 0.0
    %417 = vmatpush1.msra.mxu0 0.0
    %418 = vmatprep.subr.mxu0 0.0
    %419 = vmatpush1.msra.mxu0 0.0
    %420 = vmatprep.subr.mxu0 0.0
    %421 = vmatpush1.msra.mxu0 0.0
    %422 = vmatprep.subr.mxu0 0.0
    %423 = vmatpush1.msra.mxu0 0.0
    %424 = vmatprep.subr.mxu0 0.0
    %425 = vmatpush1.msra.mxu0 0.0
    %426 = vmatprep.subr.mxu0 0.0
    %427 = vmatpush1.msra.mxu0 0.0
    %428 = vmatprep.subr.mxu0 0.0
    %429 = vmatpush1.msra.mxu0 0.0
    %430 = vmatprep.subr.mxu0 0.0
    %431 = vmatpush1.msra.mxu0 0.0
    %432 = vmatprep.subr.mxu0 0.0
    %433 = vmatpush1.msra.mxu0 0.0
    %434 = vmatprep.subr.mxu0 0.0
    %435 = vmatpush1.msra.mxu0 0.0
    %436 = vmatprep.subr.mxu0 0.0
    %437 = vmatpush1.msra.mxu0 0.0
    %438 = vmatprep.subr.mxu0 0.0
    %439 = vmatpush1.msra.mxu0 0.0
    %440 = vmatprep.subr.mxu0 0.0
    %441 = vmatpush1.msra.mxu0 0.0
    %442 = vmatprep.subr.mxu0 0.0
    %443 = vmatpush1.msra.mxu0 0.0
    %444 = vmatprep.subr.mxu0 0.0
    %445 = vmatpush1.msra.mxu0 0.0
    %446 = vmatprep.mubr.f32.mxu0 0.0
    %447 = vmatmul.mubr.f32.gmra.mrb[0].mxu0 %v380
    %v448 = vpop.f32.mrb[0].mxu0
    %v449 = vadd.f32 0.0, %v448
    %v450 = vpop.f32.mrb[0].mxu0
    %451 = vdwg.mxu0
    %v452 = vadd.f32 %v240, %v449
    %v453 = vxor.u32 %v452, 2147483648
    %v454 = vmul.f32 %v453, 1.442695
    %v455 = vpow.pop %v454
    %v456 = vadd.f32 %v455, 1.0
    %v457 = vrcp.pop %v456
    %v458 = vmul.f32 1.0, %v457
    %v459 = vtanh.pop %v452
    %v460 = vsel %vm136, %v458, %v459
    %v461 = vmul.f32 %v460, %v370
    %463 = vrot.lane.b32.xlu0 %v460, 32
    %v464 = vpop.permute.xlu0 %463
    %v466 = vmul.f32 %v460, %v464
    %468 = vrot.lane.b32.xlu0 %v466, 32
    %v469 = vpop.permute.xlu0 %468
    %v471 = vadd.f32 %v461, %v469
    %v472 = vtanh.pop %v471
    %474 = vrot.lane.b32.xlu0 %v472, 32
    %v475 = vpop.permute.xlu0 %474
    %v477 = vmul.f32 %v460, %v475
    %479 = vrot.lane.b32.xlu0 %v477, 64
    %v480 = vpop.permute.xlu0 %479
    %v481 = vsel %vm277, %v480, 0
    %483 = vmatprep.subr.mxu0 0.0
    %484 = vmatpush1.msra.mxu0 %v273
    %485 = vmatprep.subr.mxu0 0.0
    %486 = vmatpush1.msra.mxu0 %v274
    %487 = vmatprep.subr.mxu0 0.0
    %488 = vmatpush1.msra.mxu0 %v275
    %489 = vmatprep.subr.mxu0 0.0
    %490 = vmatpush1.msra.mxu0 %v276
    %491 = vmatprep.subr.mxu0 0.0
    %492 = vmatpush1.msra.mxu0 0.0
    %493 = vmatprep.subr.mxu0 0.0
    %494 = vmatpush1.msra.mxu0 0.0
    %495 = vmatprep.subr.mxu0 0.0
    %496 = vmatpush1.msra.mxu0 0.0
    %497 = vmatprep.subr.mxu0 0.0
    %498 = vmatpush1.msra.mxu0 0.0
    %499 = vmatprep.subr.mxu0 0.0
    %500 = vmatpush1.msra.mxu0 0.0
    %501 = vmatprep.subr.mxu0 0.0
    %502 = vmatpush1.msra.mxu0 0.0
    %503 = vmatprep.subr.mxu0 0.0
    %504 = vmatpush1.msra.mxu0 0.0
    %505 = vmatprep.subr.mxu0 0.0
    %506 = vmatpush1.msra.mxu0 0.0
    %507 = vmatprep.subr.mxu0 0.0
    %508 = vmatpush1.msra.mxu0 0.0
    %509 = vmatprep.subr.mxu0 0.0
    %510 = vmatpush1.msra.mxu0 0.0
    %511 = vmatprep.subr.mxu0 0.0
    %512 = vmatpush1.msra.mxu0 0.0
    %513 = vmatprep.subr.mxu0 0.0
    %514 = vmatpush1.msra.mxu0 0.0
    %515 = vmatprep.subr.mxu0 0.0
    %516 = vmatpush1.msra.mxu0 0.0
    %517 = vmatprep.subr.mxu0 0.0
    %518 = vmatpush1.msra.mxu0 0.0
    %519 = vmatprep.subr.mxu0 0.0
    %520 = vmatpush1.msra.mxu0 0.0
    %521 = vmatprep.subr.mxu0 0.0
    %522 = vmatpush1.msra.mxu0 0.0
    %523 = vmatprep.subr.mxu0 0.0
    %524 = vmatpush1.msra.mxu0 0.0
    %525 = vmatprep.subr.mxu0 0.0
    %526 = vmatpush1.msra.mxu0 0.0
    %527 = vmatprep.subr.mxu0 0.0
    %528 = vmatpush1.msra.mxu0 0.0
    %529 = vmatprep.subr.mxu0 0.0
    %530 = vmatpush1.msra.mxu0 0.0
    %531 = vmatprep.subr.mxu0 0.0
    %532 = vmatpush1.msra.mxu0 0.0
    %533 = vmatprep.subr.mxu0 0.0
    %534 = vmatpush1.msra.mxu0 0.0
    %535 = vmatprep.subr.mxu0 0.0
    %536 = vmatpush1.msra.mxu0 0.0
    %537 = vmatprep.subr.mxu0 0.0
    %538 = vmatpush1.msra.mxu0 0.0
    %539 = vmatprep.subr.mxu0 0.0
    %540 = vmatpush1.msra.mxu0 0.0
    %541 = vmatprep.subr.mxu0 0.0
    %542 = vmatpush1.msra.mxu0 0.0
    %543 = vmatprep.subr.mxu0 0.0
    %544 = vmatpush1.msra.mxu0 0.0
    %545 = vmatprep.subr.mxu0 0.0
    %546 = vmatpush1.msra.mxu0 0.0
    %547 = vmatprep.mubr.f32.mxu0 0.0
    %548 = vmatmul.mubr.f32.gmra.mrb[0].mxu0 %v481
    %v549 = vpop.f32.mrb[0].mxu0
    %v550 = vadd.f32 0.0, %v549
    %v551 = vpop.f32.mrb[0].mxu0
    %552 = vdwg.mxu0
    %v553 = vadd.f32 %v245, %v550
    %v554 = vxor.u32 %v553, 2147483648
    %v555 = vmul.f32 %v554, 1.442695
    %v556 = vpow.pop %v555
    %v557 = vadd.f32 %v556, 1.0
    %v558 = vrcp.pop %v557
    %v559 = vmul.f32 1.0, %v558
    %v560 = vtanh.pop %v553
    %v561 = vsel %vm136, %v559, %v560
    %v562 = vmul.f32 %v561, %v471
    %564 = vrot.lane.b32.xlu0 %v561, 32
    %v565 = vpop.permute.xlu0 %564
    %v567 = vmul.f32 %v561, %v565
    %569 = vrot.lane.b32.xlu0 %v567, 32
    %v570 = vpop.permute.xlu0 %569
    %v572 = vadd.f32 %v562, %v570
    %v573 = vtanh.pop %v572
    %575 = vrot.lane.b32.xlu0 %v573, 32
    %v576 = vpop.permute.xlu0 %575
    %v578 = vmul.f32 %v561, %v576
    %580 = vrot.lane.b32.xlu0 %v578, 64
    %v581 = vpop.permute.xlu0 %580
    %v582 = vsel %vm277, %v581, 0
    %584 = vmatprep.subr.mxu0 0.0
    %585 = vmatpush1.msra.mxu0 %v273
    %586 = vmatprep.subr.mxu0 0.0
    %587 = vmatpush1.msra.mxu0 %v274
    %588 = vmatprep.subr.mxu0 0.0
    %589 = vmatpush1.msra.mxu0 %v275
    %590 = vmatprep.subr.mxu0 0.0
    %591 = vmatpush1.msra.mxu0 %v276
    %592 = vmatprep.subr.mxu0 0.0
    %593 = vmatpush1.msra.mxu0 0.0
    %594 = vmatprep.subr.mxu0 0.0
    %595 = vmatpush1.msra.mxu0 0.0
    %596 = vmatprep.subr.mxu0 0.0
    %597 = vmatpush1.msra.mxu0 0.0
    %598 = vmatprep.subr.mxu0 0.0
    %599 = vmatpush1.msra.mxu0 0.0
    %600 = vmatprep.subr.mxu0 0.0
    %601 = vmatpush1.msra.mxu0 0.0
    %602 = vmatprep.subr.mxu0 0.0
    %603 = vmatpush1.msra.mxu0 0.0
    %604 = vmatprep.subr.mxu0 0.0
    %605 = vmatpush1.msra.mxu0 0.0
    %606 = vmatprep.subr.mxu0 0.0
    %607 = vmatpush1.msra.mxu0 0.0
    %608 = vmatprep.subr.mxu0 0.0
    %609 = vmatpush1.msra.mxu0 0.0
    %610 = vmatprep.subr.mxu0 0.0
    %611 = vmatpush1.msra.mxu0 0.0
    %612 = vmatprep.subr.mxu0 0.0
    %613 = vmatpush1.msra.mxu0 0.0
    %614 = vmatprep.subr.mxu0 0.0
    %615 = vmatpush1.msra.mxu0 0.0
    %616 = vmatprep.subr.mxu0 0.0
    %617 = vmatpush1.msra.mxu0 0.0
    %618 = vmatprep.subr.mxu0 0.0
    %619 = vmatpush1.msra.mxu0 0.0
    %620 = vmatprep.subr.mxu0 0.0
    %621 = vmatpush1.msra.mxu0 0.0
    %622 = vmatprep.subr.mxu0 0.0
    %623 = vmatpush1.msra.mxu0 0.0
    %624 = vmatprep.subr.mxu0 0.0
    %625 = vmatpush1.msra.mxu0 0.0
    %626 = vmatprep.subr.mxu0 0.0
    %627 = vmatpush1.msra.mxu0 0.0
    %628 = vmatprep.subr.mxu0 0.0
    %629 = vmatpush1.msra.mxu0 0.0
    %630 = vmatprep.subr.mxu0 0.0
    %631 = vmatpush1.msra.mxu0 0.0
    %632 = vmatprep.subr.mxu0 0.0
    %633 = vmatpush1.msra.mxu0 0.0
    %634 = vmatprep.subr.mxu0 0.0
    %635 = vmatpush1.msra.mxu0 0.0
    %636 = vmatprep.subr.mxu0 0.0
    %637 = vmatpush1.msra.mxu0 0.0
    %638 = vmatprep.subr.mxu0 0.0
    %639 = vmatpush1.msra.mxu0 0.0
    %640 = vmatprep.subr.mxu0 0.0
    %641 = vmatpush1.msra.mxu0 0.0
    %642 = vmatprep.subr.mxu0 0.0
    %643 = vmatpush1.msra.mxu0 0.0
    %644 = vmatprep.subr.mxu0 0.0
    %645 = vmatpush1.msra.mxu0 0.0
    %646 = vmatprep.subr.mxu0 0.0
    %647 = vmatpush1.msra.mxu0 0.0
    %648 = vmatprep.mubr.f32.mxu0 0.0
    %649 = vmatmul.mubr.f32.gmra.mrb[0].mxu0 %v582
    %v650 = vpop.f32.mrb[0].mxu0
    %v651 = vadd.f32 0.0, %v650
    %v652 = vpop.f32.mrb[0].mxu0
    %653 = vdwg.mxu0
    %v654 = vadd.f32 %v250, %v651
    %v655 = vxor.u32 %v654, 2147483648
    %v656 = vmul.f32 %v655, 1.442695
    %v657 = vpow.pop %v656
    %v658 = vadd.f32 %v657, 1.0
    %v659 = vrcp.pop %v658
    %v660 = vmul.f32 1.0, %v659
    %v661 = vtanh.pop %v654
    %v662 = vsel %vm136, %v660, %v661
    %v663 = vmul.f32 %v662, %v572
    %665 = vrot.lane.b32.xlu0 %v662, 32
    %v666 = vpop.permute.xlu0 %665
    %v668 = vmul.f32 %v662, %v666
    %670 = vrot.lane.b32.xlu0 %v668, 32
    %v671 = vpop.permute.xlu0 %670
    %v673 = vadd.f32 %v663, %v671
    %v674 = vtanh.pop %v673
    %676 = vrot.lane.b32.xlu0 %v674, 32
    %v677 = vpop.permute.xlu0 %676
    %v679 = vmul.f32 %v662, %v677
    %681 = vrot.lane.b32.xlu0 %v679, 64
    %v682 = vpop.permute.xlu0 %681
    %v683 = vsel %vm277, %v682, 0
    %685 = vmatprep.subr.mxu0 0.0
    %686 = vmatpush1.msra.mxu0 %v273
    %687 = vmatprep.subr.mxu0 0.0
    %688 = vmatpush1.msra.mxu0 %v274
    %689 = vmatprep.subr.mxu0 0.0
    %690 = vmatpush1.msra.mxu0 %v275
    %691 = vmatprep.subr.mxu0 0.0
    %692 = vmatpush1.msra.mxu0 %v276
    %693 = vmatprep.subr.mxu0 0.0
    %694 = vmatpush1.msra.mxu0 0.0
    %695 = vmatprep.subr.mxu0 0.0
    %696 = vmatpush1.msra.mxu0 0.0
    %697 = vmatprep.subr.mxu0 0.0
    %698 = vmatpush1.msra.mxu0 0.0
    %699 = vmatprep.subr.mxu0 0.0
    %700 = vmatpush1.msra.mxu0 0.0
    %701 = vmatprep.subr.mxu0 0.0
    %702 = vmatpush1.msra.mxu0 0.0
    %703 = vmatprep.subr.mxu0 0.0
    %704 = vmatpush1.msra.mxu0 0.0
    %705 = vmatprep.subr.mxu0 0.0
    %706 = vmatpush1.msra.mxu0 0.0
    %707 = vmatprep.subr.mxu0 0.0
    %708 = vmatpush1.msra.mxu0 0.0
    %709 = vmatprep.subr.mxu0 0.0
    %710 = vmatpush1.msra.mxu0 0.0
    %711 = vmatprep.subr.mxu0 0.0
    %712 = vmatpush1.msra.mxu0 0.0
    %713 = vmatprep.subr.mxu0 0.0
    %714 = vmatpush1.msra.mxu0 0.0
    %715 = vmatprep.subr.mxu0 0.0
    %716 = vmatpush1.msra.mxu0 0.0
    %717 = vmatprep.subr.mxu0 0.0
    %718 = vmatpush1.msra.mxu0 0.0
    %719 = vmatprep.subr.mxu0 0.0
    %720 = vmatpush1.msra.mxu0 0.0
    %721 = vmatprep.subr.mxu0 0.0
    %722 = vmatpush1.msra.mxu0 0.0
    %723 = vmatprep.subr.mxu0 0.0
    %724 = vmatpush1.msra.mxu0 0.0
    %725 = vmatprep.subr.mxu0 0.0
    %726 = vmatpush1.msra.mxu0 0.0
    %727 = vmatprep.subr.mxu0 0.0
    %728 = vmatpush1.msra.mxu0 0.0
    %729 = vmatprep.subr.mxu0 0.0
    %730 = vmatpush1.msra.mxu0 0.0
    %731 = vmatprep.subr.mxu0 0.0
    %732 = vmatpush1.msra.mxu0 0.0
    %733 = vmatprep.subr.mxu0 0.0
    %734 = vmatpush1.msra.mxu0 0.0
    %735 = vmatprep.subr.mxu0 0.0
    %736 = vmatpush1.msra.mxu0 0.0
    %737 = vmatprep.subr.mxu0 0.0
    %738 = vmatpush1.msra.mxu0 0.0
    %739 = vmatprep.subr.mxu0 0.0
    %740 = vmatpush1.msra.mxu0 0.0
    %741 = vmatprep.subr.mxu0 0.0
    %742 = vmatpush1.msra.mxu0 0.0
    %743 = vmatprep.subr.mxu0 0.0
    %744 = vmatpush1.msra.mxu0 0.0
    %745 = vmatprep.subr.mxu0 0.0
    %746 = vmatpush1.msra.mxu0 0.0
    %747 = vmatprep.subr.mxu0 0.0
    %748 = vmatpush1.msra.mxu0 0.0
    %749 = vmatprep.mubr.f32.mxu0 0.0
    %750 = vmatmul.mubr.f32.gmra.mrb[0].mxu0 %v683
    %v751 = vpop.f32.mrb[0].mxu0
    %v752 = vadd.f32 0.0, %v751
    %v753 = vpop.f32.mrb[0].mxu0
    %754 = vdwg.mxu0
    %v755 = vadd.f32 %v255, %v752
    %v756 = vxor.u32 %v755, 2147483648
    %v757 = vmul.f32 %v756, 1.442695
    %v758 = vpow.pop %v757
    %v759 = vadd.f32 %v758, 1.0
    %v760 = vrcp.pop %v759
    %v761 = vmul.f32 1.0, %v760
    %v762 = vtanh.pop %v755
    %v763 = vsel %vm136, %v761, %v762
    %v764 = vmul.f32 %v763, %v673
    %766 = vrot.lane.b32.xlu0 %v763, 32
    %v767 = vpop.permute.xlu0 %766
    %v769 = vmul.f32 %v763, %v767
    %771 = vrot.lane.b32.xlu0 %v769, 32
    %v772 = vpop.permute.xlu0 %771
    %v774 = vadd.f32 %v764, %v772
    %v775 = vtanh.pop %v774
    %777 = vrot.lane.b32.xlu0 %v775, 32
    %v778 = vpop.permute.xlu0 %777
    %v780 = vmul.f32 %v763, %v778
    %782 = vrot.lane.b32.xlu0 %v780, 64
    %v783 = vpop.permute.xlu0 %782
    %v784 = vsel %vm277, %v783, 0
    %786 = vmatprep.subr.mxu0 0.0
    %787 = vmatpush1.msra.mxu0 %v273
    %788 = vmatprep.subr.mxu0 0.0
    %789 = vmatpush1.msra.mxu0 %v274
    %790 = vmatprep.subr.mxu0 0.0
    %791 = vmatpush1.msra.mxu0 %v275
    %792 = vmatprep.subr.mxu0 0.0
    %793 = vmatpush1.msra.mxu0 %v276
    %794 = vmatprep.subr.mxu0 0.0
    %795 = vmatpush1.msra.mxu0 0.0
    %796 = vmatprep.subr.mxu0 0.0
    %797 = vmatpush1.msra.mxu0 0.0
    %798 = vmatprep.subr.mxu0 0.0
    %799 = vmatpush1.msra.mxu0 0.0
    %800 = vmatprep.subr.mxu0 0.0
    %801 = vmatpush1.msra.mxu0 0.0
    %802 = vmatprep.subr.mxu0 0.0
    %803 = vmatpush1.msra.mxu0 0.0
    %804 = vmatprep.subr.mxu0 0.0
    %805 = vmatpush1.msra.mxu0 0.0
    %806 = vmatprep.subr.mxu0 0.0
    %807 = vmatpush1.msra.mxu0 0.0
    %808 = vmatprep.subr.mxu0 0.0
    %809 = vmatpush1.msra.mxu0 0.0
    %810 = vmatprep.subr.mxu0 0.0
    %811 = vmatpush1.msra.mxu0 0.0
    %812 = vmatprep.subr.mxu0 0.0
    %813 = vmatpush1.msra.mxu0 0.0
    %814 = vmatprep.subr.mxu0 0.0
    %815 = vmatpush1.msra.mxu0 0.0
    %816 = vmatprep.subr.mxu0 0.0
    %817 = vmatpush1.msra.mxu0 0.0
    %818 = vmatprep.subr.mxu0 0.0
    %819 = vmatpush1.msra.mxu0 0.0
    %820 = vmatprep.subr.mxu0 0.0
    %821 = vmatpush1.msra.mxu0 0.0
    %822 = vmatprep.subr.mxu0 0.0
    %823 = vmatpush1.msra.mxu0 0.0
    %824 = vmatprep.subr.mxu0 0.0
    %825 = vmatpush1.msra.mxu0 0.0
    %826 = vmatprep.subr.mxu0 0.0
    %827 = vmatpush1.msra.mxu0 0.0
    %828 = vmatprep.subr.mxu0 0.0
    %829 = vmatpush1.msra.mxu0 0.0
    %830 = vmatprep.subr.mxu0 0.0
    %831 = vmatpush1.msra.mxu0 0.0
    %832 = vmatprep.subr.mxu0 0.0
    %833 = vmatpush1.msra.mxu0 0.0
    %834 = vmatprep.subr.mxu0 0.0
    %835 = vmatpush1.msra.mxu0 0.0
    %836 = vmatprep.subr.mxu0 0.0
    %837 = vmatpush1.msra.mxu0 0.0
    %838 = vmatprep.subr.mxu0 0.0
    %839 = vmatpush1.msra.mxu0 0.0
    %840 = vmatprep.subr.mxu0 0.0
    %841 = vmatpush1.msra.mxu0 0.0
    %842 = vmatprep.subr.mxu0 0.0
    %843 = vmatpush1.msra.mxu0 0.0
    %844 = vmatprep.subr.mxu0 0.0
    %845 = vmatpush1.msra.mxu0 0.0
    %846 = vmatprep.subr.mxu0 0.0
    %847 = vmatpush1.msra.mxu0 0.0
    %848 = vmatprep.subr.mxu0 0.0
    %849 = vmatpush1.msra.mxu0 0.0
    %850 = vmatprep.mubr.f32.mxu0 0.0
    %851 = vmatmul.mubr.f32.gmra.mrb[0].mxu0 %v784
    %v852 = vpop.f32.mrb[0].mxu0
    %v853 = vadd.f32 0.0, %v852
    %v854 = vpop.f32.mrb[0].mxu0
    %855 = vdwg.mxu0
    %v856 = vadd.f32 %v260, %v853
    %v857 = vxor.u32 %v856, 2147483648
    %v858 = vmul.f32 %v857, 1.442695
    %v859 = vpow.pop %v858
    %v860 = vadd.f32 %v859, 1.0
    %v861 = vrcp.pop %v860
    %v862 = vmul.f32 1.0, %v861
    %v863 = vtanh.pop %v856
    %v864 = vsel %vm136, %v862, %v863
    %v865 = vmul.f32 %v864, %v774
    %867 = vrot.lane.b32.xlu0 %v864, 32
    %v868 = vpop.permute.xlu0 %867
    %v870 = vmul.f32 %v864, %v868
    %872 = vrot.lane.b32.xlu0 %v870, 32
    %v873 = vpop.permute.xlu0 %872
    %v875 = vadd.f32 %v865, %v873
    %v876 = vtanh.pop %v875
    %878 = vrot.lane.b32.xlu0 %v876, 32
    %v879 = vpop.permute.xlu0 %878
    %v881 = vmul.f32 %v864, %v879
    %883 = vrot.lane.b32.xlu0 %v881, 64
    %v884 = vpop.permute.xlu0 %883
    %v885 = vsel %vm277, %v884, 0
    %887 = vmatprep.subr.mxu0 0.0
    %888 = vmatpush1.msra.mxu0 %v273
    %889 = vmatprep.subr.mxu0 0.0
    %890 = vmatpush1.msra.mxu0 %v274
    %891 = vmatprep.subr.mxu0 0.0
    %892 = vmatpush1.msra.mxu0 %v275
    %893 = vmatprep.subr.mxu0 0.0
    %894 = vmatpush1.msra.mxu0 %v276
    %895 = vmatprep.subr.mxu0 0.0
    %896 = vmatpush1.msra.mxu0 0.0
    %897 = vmatprep.subr.mxu0 0.0
    %898 = vmatpush1.msra.mxu0 0.0
    %899 = vmatprep.subr.mxu0 0.0
    %900 = vmatpush1.msra.mxu0 0.0
    %901 = vmatprep.subr.mxu0 0.0
    %902 = vmatpush1.msra.mxu0 0.0
    %903 = vmatprep.subr.mxu0 0.0
    %904 = vmatpush1.msra.mxu0 0.0
    %905 = vmatprep.subr.mxu0 0.0
    %906 = vmatpush1.msra.mxu0 0.0
    %907 = vmatprep.subr.mxu0 0.0
    %908 = vmatpush1.msra.mxu0 0.0
    %909 = vmatprep.subr.mxu0 0.0
    %910 = vmatpush1.msra.mxu0 0.0
    %911 = vmatprep.subr.mxu0 0.0
    %912 = vmatpush1.msra.mxu0 0.0
    %913 = vmatprep.subr.mxu0 0.0
    %914 = vmatpush1.msra.mxu0 0.0
    %915 = vmatprep.subr.mxu0 0.0
    %916 = vmatpush1.msra.mxu0 0.0
    %917 = vmatprep.subr.mxu0 0.0
    %918 = vmatpush1.msra.mxu0 0.0
    %919 = vmatprep.subr.mxu0 0.0
    %920 = vmatpush1.msra.mxu0 0.0
    %921 = vmatprep.subr.mxu0 0.0
    %922 = vmatpush1.msra.mxu0 0.0
    %923 = vmatprep.subr.mxu0 0.0
    %924 = vmatpush1.msra.mxu0 0.0
    %925 = vmatprep.subr.mxu0 0.0
    %926 = vmatpush1.msra.mxu0 0.0
    %927 = vmatprep.subr.mxu0 0.0
    %928 = vmatpush1.msra.mxu0 0.0
    %929 = vmatprep.subr.mxu0 0.0
    %930 = vmatpush1.msra.mxu0 0.0
    %931 = vmatprep.subr.mxu0 0.0
    %932 = vmatpush1.msra.mxu0 0.0
    %933 = vmatprep.subr.mxu0 0.0
    %934 = vmatpush1.msra.mxu0 0.0
    %935 = vmatprep.subr.mxu0 0.0
    %936 = vmatpush1.msra.mxu0 0.0
    %937 = vmatprep.subr.mxu0 0.0
    %938 = vmatpush1.msra.mxu0 0.0
    %939 = vmatprep.subr.mxu0 0.0
    %940 = vmatpush1.msra.mxu0 0.0
    %941 = vmatprep.subr.mxu0 0.0
    %942 = vmatpush1.msra.mxu0 0.0
    %943 = vmatprep.subr.mxu0 0.0
    %944 = vmatpush1.msra.mxu0 0.0
    %945 = vmatprep.subr.mxu0 0.0
    %946 = vmatpush1.msra.mxu0 0.0
    %947 = vmatprep.subr.mxu0 0.0
    %948 = vmatpush1.msra.mxu0 0.0
    %949 = vmatprep.subr.mxu0 0.0
    %950 = vmatpush1.msra.mxu0 0.0
    %951 = vmatprep.mubr.f32.mxu0 0.0
    %952 = vmatmul.mubr.f32.gmra.mrb[0].mxu0 %v885
    %v953 = vpop.f32.mrb[0].mxu0
    %v954 = vadd.f32 0.0, %v953
    %v955 = vpop.f32.mrb[0].mxu0
    %956 = vdwg.mxu0
    %v957 = vadd.f32 %v265, %v954
    %v958 = vxor.u32 %v957, 2147483648
    %v959 = vmul.f32 %v958, 1.442695
    %v960 = vpow.pop %v959
    %v961 = vadd.f32 %v960, 1.0
    %v962 = vrcp.pop %v961
    %v963 = vmul.f32 1.0, %v962
    %v964 = vtanh.pop %v957
    %v965 = vsel %vm136, %v963, %v964
    %v966 = vmul.f32 %v965, %v875
    %968 = vrot.lane.b32.xlu0 %v965, 32
    %v969 = vpop.permute.xlu0 %968
    %v971 = vmul.f32 %v965, %v969
    %973 = vrot.lane.b32.xlu0 %v971, 32
    %v974 = vpop.permute.xlu0 %973
    %v976 = vadd.f32 %v966, %v974
    %v977 = vtanh.pop %v976
    %979 = vrot.lane.b32.xlu0 %v977, 32
    %v980 = vpop.permute.xlu0 %979
    %v982 = vmul.f32 %v965, %v980
    %984 = vrot.lane.b32.xlu0 %v982, 64
    %v985 = vpop.permute.xlu0 %984
    %v986 = vsel %vm277, %v985, 0
    %988 = vmatprep.subr.mxu0 0.0
    %989 = vmatpush1.msra.mxu0 %v273
    %990 = vmatprep.subr.mxu0 0.0
    %991 = vmatpush1.msra.mxu0 %v274
    %992 = vmatprep.subr.mxu0 0.0
    %993 = vmatpush1.msra.mxu0 %v275
    %994 = vmatprep.subr.mxu0 0.0
    %995 = vmatpush1.msra.mxu0 %v276
    %996 = vmatprep.subr.mxu0 0.0
    %997 = vmatpush1.msra.mxu0 0.0
    %998 = vmatprep.subr.mxu0 0.0
    %999 = vmatpush1.msra.mxu0 0.0
    %1000 = vmatprep.subr.mxu0 0.0
    %1001 = vmatpush1.msra.mxu0 0.0
    %1002 = vmatprep.subr.mxu0 0.0
    %1003 = vmatpush1.msra.mxu0 0.0
    %1004 = vmatprep.subr.mxu0 0.0
    %1005 = vmatpush1.msra.mxu0 0.0
    %1006 = vmatprep.subr.mxu0 0.0
    %1007 = vmatpush1.msra.mxu0 0.0
    %1008 = vmatprep.subr.mxu0 0.0
    %1009 = vmatpush1.msra.mxu0 0.0
    %1010 = vmatprep.subr.mxu0 0.0
    %1011 = vmatpush1.msra.mxu0 0.0
    %1012 = vmatprep.subr.mxu0 0.0
    %1013 = vmatpush1.msra.mxu0 0.0
    %1014 = vmatprep.subr.mxu0 0.0
    %1015 = vmatpush1.msra.mxu0 0.0
    %1016 = vmatprep.subr.mxu0 0.0
    %1017 = vmatpush1.msra.mxu0 0.0
    %1018 = vmatprep.subr.mxu0 0.0
    %1019 = vmatpush1.msra.mxu0 0.0
    %1020 = vmatprep.subr.mxu0 0.0
    %1021 = vmatpush1.msra.mxu0 0.0
    %1022 = vmatprep.subr.mxu0 0.0
    %1023 = vmatpush1.msra.mxu0 0.0
    %1024 = vmatprep.subr.mxu0 0.0
    %1025 = vmatpush1.msra.mxu0 0.0
    %1026 = vmatprep.subr.mxu0 0.0
    %1027 = vmatpush1.msra.mxu0 0.0
    %1028 = vmatprep.subr.mxu0 0.0
    %1029 = vmatpush1.msra.mxu0 0.0
    %1030 = vmatprep.subr.mxu0 0.0
    %1031 = vmatpush1.msra.mxu0 0.0
    %1032 = vmatprep.subr.mxu0 0.0
    %1033 = vmatpush1.msra.mxu0 0.0
    %1034 = vmatprep.subr.mxu0 0.0
    %1035 = vmatpush1.msra.mxu0 0.0
    %1036 = vmatprep.subr.mxu0 0.0
    %1037 = vmatpush1.msra.mxu0 0.0
    %1038 = vmatprep.subr.mxu0 0.0
    %1039 = vmatpush1.msra.mxu0 0.0
    %1040 = vmatprep.subr.mxu0 0.0
    %1041 = vmatpush1.msra.mxu0 0.0
    %1042 = vmatprep.subr.mxu0 0.0
    %1043 = vmatpush1.msra.mxu0 0.0
    %1044 = vmatprep.subr.mxu0 0.0
    %1045 = vmatpush1.msra.mxu0 0.0
    %1046 = vmatprep.subr.mxu0 0.0
    %1047 = vmatpush1.msra.mxu0 0.0
    %1048 = vmatprep.subr.mxu0 0.0
    %1049 = vmatpush1.msra.mxu0 0.0
    %1050 = vmatprep.subr.mxu0 0.0
    %1051 = vmatpush1.msra.mxu0 0.0
    %1052 = vmatprep.mubr.f32.mxu0 0.0
    %1053 = vmatmul.mubr.f32.gmra.mrb[0].mxu0 %v986
    %v1054 = vpop.f32.mrb[0].mxu0
    %v1055 = vadd.f32 0.0, %v1054
    %v1056 = vpop.f32.mrb[0].mxu0
    %1057 = vdwg.mxu0
    %v1058 = vadd.f32 %v270, %v1055
    %v1059 = vxor.u32 %v1058, 2147483648
    %v1060 = vmul.f32 %v1059, 1.442695
    %v1061 = vpow.pop %v1060
    %v1062 = vadd.f32 %v1061, 1.0
    %v1063 = vrcp.pop %v1062
    %v1064 = vmul.f32 1.0, %v1063
    %v1065 = vtanh.pop %v1058
    %v1066 = vsel %vm136, %v1064, %v1065
    %v1067 = vmul.f32 %v1066, %v976
    %1069 = vrot.lane.b32.xlu0 %v1066, 32
    %v1070 = vpop.permute.xlu0 %1069
    %v1072 = vmul.f32 %v1066, %v1070
    %1074 = vrot.lane.b32.xlu0 %v1072, 32
    %v1075 = vpop.permute.xlu0 %1074
    %v1077 = vadd.f32 %v1067, %v1075
    %v1078 = vtanh.pop %v1077
    %1080 = vrot.lane.b32.xlu0 %v1078, 32
    %v1081 = vpop.permute.xlu0 %1080
    %v1083 = vmul.f32 %v1066, %v1081
    %v1084 = vld [vmem:[#allocation7] sm:$0xff]
    %v1085 = vld [vmem:[#allocation7 + $0x8] sm:$0xff]
    %v1086 = vld [vmem:[#allocation7 + $0x10] sm:$0xff]
    %v1087 = vld [vmem:[#allocation7 + $0x18] sm:$0xff]
    %v1088 = vld [vmem:[%s6] sm:$0x1]
    %v1090 = vlaneseq
    %v1091 = vshrl.u32 %v1090, 7
    %v1092 = vsub.s32 0, %v1091
    %v1093 = vrot.slane %v1088, %v1092
    %1096 = vrot.lane.b32.xlu0 %v1083, 64
    %v1097 = vpop.permute.xlu0 %1096
    %v1098 = vsel %vm277, %v1097, 0
    %1100 = vmatprep.subr.mxu0 0.0
    %1101 = vmatpush1.msra.mxu0 %v1084
    %1102 = vmatprep.subr.mxu0 0.0
    %1103 = vmatpush1.msra.mxu0 %v1085
    %1104 = vmatprep.subr.mxu0 0.0
    %1105 = vmatpush1.msra.mxu0 %v1086
    %1106 = vmatprep.subr.mxu0 0.0
    %1107 = vmatpush1.msra.mxu0 %v1087
    %1108 = vmatprep.subr.mxu0 0.0
    %1109 = vmatpush1.msra.mxu0 0.0
    %1110 = vmatprep.subr.mxu0 0.0
    %1111 = vmatpush1.msra.mxu0 0.0
    %1112 = vmatprep.subr.mxu0 0.0
    %1113 = vmatpush1.msra.mxu0 0.0
    %1114 = vmatprep.subr.mxu0 0.0
    %1115 = vmatpush1.msra.mxu0 0.0
    %1116 = vmatprep.subr.mxu0 0.0
    %1117 = vmatpush1.msra.mxu0 0.0
    %1118 = vmatprep.subr.mxu0 0.0
    %1119 = vmatpush1.msra.mxu0 0.0
    %1120 = vmatprep.subr.mxu0 0.0
    %1121 = vmatpush1.msra.mxu0 0.0
    %1122 = vmatprep.subr.mxu0 0.0
    %1123 = vmatpush1.msra.mxu0 0.0
    %1124 = vmatprep.subr.mxu0 0.0
    %1125 = vmatpush1.msra.mxu0 0.0
    %1126 = vmatprep.subr.mxu0 0.0
    %1127 = vmatpush1.msra.mxu0 0.0
    %1128 = vmatprep.subr.mxu0 0.0
    %1129 = vmatpush1.msra.mxu0 0.0
    %1130 = vmatprep.subr.mxu0 0.0
    %1131 = vmatpush1.msra.mxu0 0.0
    %1132 = vmatprep.subr.mxu0 0.0
    %1133 = vmatpush1.msra.mxu0 0.0
    %1134 = vmatprep.subr.mxu0 0.0
    %1135 = vmatpush1.msra.mxu0 0.0
    %1136 = vmatprep.subr.mxu0 0.0
    %1137 = vmatpush1.msra.mxu0 0.0
    %1138 = vmatprep.subr.mxu0 0.0
    %1139 = vmatpush1.msra.mxu0 0.0
    %1140 = vmatprep.subr.mxu0 0.0
    %1141 = vmatpush1.msra.mxu0 0.0
    %1142 = vmatprep.subr.mxu0 0.0
    %1143 = vmatpush1.msra.mxu0 0.0
    %1144 = vmatprep.subr.mxu0 0.0
    %1145 = vmatpush1.msra.mxu0 0.0
    %1146 = vmatprep.subr.mxu0 0.0
    %1147 = vmatpush1.msra.mxu0 0.0
    %1148 = vmatprep.subr.mxu0 0.0
    %1149 = vmatpush1.msra.mxu0 0.0
    %1150 = vmatprep.subr.mxu0 0.0
    %1151 = vmatpush1.msra.mxu0 0.0
    %1152 = vmatprep.subr.mxu0 0.0
    %1153 = vmatpush1.msra.mxu0 0.0
    %1154 = vmatprep.subr.mxu0 0.0
    %1155 = vmatpush1.msra.mxu0 0.0
    %1156 = vmatprep.subr.mxu0 0.0
    %1157 = vmatpush1.msra.mxu0 0.0
    %1158 = vmatprep.subr.mxu0 0.0
    %1159 = vmatpush1.msra.mxu0 0.0
    %1160 = vmatprep.subr.mxu0 0.0
    %1161 = vmatpush1.msra.mxu0 0.0
    %1162 = vmatprep.subr.mxu0 0.0
    %1163 = vmatpush1.msra.mxu0 0.0
    %1164 = vmatprep.mubr.f32.mxu0 0.0
    %1165 = vmatmul.mubr.f32.gmra.mrb[0].mxu0 %v380
    %v1166 = vpop.f32.mrb[0].mxu0
    %v1167 = vadd.f32 %v1093, %v1166
    %v1168 = vpop.f32.mrb[0].mxu0
    %1169 = vmatprep.mubr.f32.mxu0 0.0
    %1170 = vmatmul.mubr.f32.gmra.mrb[0].mxu0 %v481
    %v1171 = vpop.f32.mrb[0].mxu0
    %v1172 = vadd.f32 %v1093, %v1171
    %v1173 = vpop.f32.mrb[0].mxu0
    %1174 = vmatprep.mubr.f32.mxu0 0.0
    %1175 = vmatmul.mubr.f32.gmra.mrb[0].mxu0 %v582
    %v1176 = vpop.f32.mrb[0].mxu0
    %v1177 = vadd.f32 %v1093, %v1176
    %v1178 = vpop.f32.mrb[0].mxu0
    %1179 = vmatprep.mubr.f32.mxu0 0.0
    %1180 = vmatmul.mubr.f32.gmra.mrb[0].mxu0 %v683
    %v1181 = vpop.f32.mrb[0].mxu0
    %v1182 = vadd.f32 %v1093, %v1181
    %v1183 = vpop.f32.mrb[0].mxu0
    %1184 = vmatprep.mubr.f32.mxu0 0.0
    %1185 = vmatmul.mubr.f32.gmra.mrb[0].mxu0 %v784
    %v1186 = vpop.f32.mrb[0].mxu0
    %v1187 = vadd.f32 %v1093, %v1186
    %v1188 = vpop.f32.mrb[0].mxu0
    %1189 = vmatprep.mubr.f32.mxu0 0.0
    %1190 = vmatmul.mubr.f32.gmra.mrb[0].mxu0 %v885
    %v1191 = vpop.f32.mrb[0].mxu0
    %v1192 = vadd.f32 %v1093, %v1191
    %v1193 = vpop.f32.mrb[0].mxu0
    %1194 = vmatprep.mubr.f32.mxu0 0.0
    %1195 = vmatmul.mubr.f32.gmra.mrb[0].mxu0 %v986
    %v1196 = vpop.f32.mrb[0].mxu0
    %v1197 = vadd.f32 %v1093, %v1196
    %v1198 = vpop.f32.mrb[0].mxu0
    %1199 = vmatprep.mubr.f32.mxu0 0.0
    %1200 = vmatmul.mubr.f32.gmra.mrb[0].mxu0 %v1098
    %v1201 = vpop.f32.mrb[0].mxu0
    %v1202 = vadd.f32 %v1093, %v1201
    %v1203 = vpop.f32.mrb[0].mxu0
    %1204 = vdwg.mxu0
    %v1205 = vld [vmem:[#allocation10] sm:$0xff]
    %v1206 = vld [vmem:[#allocation10 + $0x8] sm:$0xff]
    %v1207 = vld [vmem:[#allocation10 + $0x10] sm:$0xff]
    %v1208 = vld [vmem:[#allocation10 + $0x18] sm:$0xff]
    %1209 = vmatprep.subr.mxu0 0.0
    %1210 = vmatpush1.msra.mxu0 %v1205
    %1211 = vmatprep.subr.mxu0 0.0
    %1212 = vmatpush1.msra.mxu0 %v1206
    %1213 = vmatprep.subr.mxu0 0.0
    %1214 = vmatpush1.msra.mxu0 %v1207
    %1215 = vmatprep.subr.mxu0 0.0
    %1216 = vmatpush1.msra.mxu0 %v1208
    %1217 = vmatprep.subr.mxu0 0.0
    %1218 = vmatpush1.msra.mxu0 0.0
    %1219 = vmatprep.subr.mxu0 0.0
    %1220 = vmatpush1.msra.mxu0 0.0
    %1221 = vmatprep.subr.mxu0 0.0
    %1222 = vmatpush1.msra.mxu0 0.0
    %1223 = vmatprep.subr.mxu0 0.0
    %1224 = vmatpush1.msra.mxu0 0.0
    %1225 = vmatprep.subr.mxu0 0.0
    %1226 = vmatpush1.msra.mxu0 0.0
    %1227 = vmatprep.subr.mxu0 0.0
    %1228 = vmatpush1.msra.mxu0 0.0
    %1229 = vmatprep.subr.mxu0 0.0
    %1230 = vmatpush1.msra.mxu0 0.0
    %1231 = vmatprep.subr.mxu0 0.0
    %1232 = vmatpush1.msra.mxu0 0.0
    %1233 = vmatprep.subr.mxu0 0.0
    %1234 = vmatpush1.msra.mxu0 0.0
    %1235 = vmatprep.subr.mxu0 0.0
    %1236 = vmatpush1.msra.mxu0 0.0
    %1237 = vmatprep.subr.mxu0 0.0
    %1238 = vmatpush1.msra.mxu0 0.0
    %1239 = vmatprep.subr.mxu0 0.0
    %1240 = vmatpush1.msra.mxu0 0.0
    %1241 = vmatprep.subr.mxu0 0.0
    %1242 = vmatpush1.msra.mxu0 0.0
    %1243 = vmatprep.subr.mxu0 0.0
    %1244 = vmatpush1.msra.mxu0 0.0
    %1245 = vmatprep.subr.mxu0 0.0
    %1246 = vmatpush1.msra.mxu0 0.0
    %1247 = vmatprep.subr.mxu0 0.0
    %1248 = vmatpush1.msra.mxu0 0.0
    %1249 = vmatprep.subr.mxu0 0.0
    %1250 = vmatpush1.msra.mxu0 0.0
    %1251 = vmatprep.subr.mxu0 0.0
    %1252 = vmatpush1.msra.mxu0 0.0
    %1253 = vmatprep.subr.mxu0 0.0
    %1254 = vmatpush1.msra.mxu0 0.0
    %1255 = vmatprep.subr.mxu0 0.0
    %1256 = vmatpush1.msra.mxu0 0.0
    %1257 = vmatprep.subr.mxu0 0.0
    %1258 = vmatpush1.msra.mxu0 0.0
    %1259 = vmatprep.subr.mxu0 0.0
    %1260 = vmatpush1.msra.mxu0 0.0
    %1261 = vmatprep.subr.mxu0 0.0
    %1262 = vmatpush1.msra.mxu0 0.0
    %1263 = vmatprep.subr.mxu0 0.0
    %1264 = vmatpush1.msra.mxu0 0.0
    %1265 = vmatprep.subr.mxu0 0.0
    %1266 = vmatpush1.msra.mxu0 0.0
    %1267 = vmatprep.subr.mxu0 0.0
    %1268 = vmatpush1.msra.mxu0 0.0
    %1269 = vmatprep.subr.mxu0 0.0
    %1270 = vmatpush1.msra.mxu0 0.0
    %1271 = vmatprep.subr.mxu0 0.0
    %1272 = vmatpush1.msra.mxu0 0.0
    %1273 = vmatprep.mubr.f32.mxu0 0.0
    %1274 = vmatmul.mubr.f32.gmra.mrb[0].mxu0 %v279
    %v1275 = vpop.f32.mrb[0].mxu0
    %v1276 = vadd.f32 0.0, %v1275
    %v1277 = vpop.f32.mrb[0].mxu0
    %1278 = vdwg.mxu0
    %v1279 = vadd.f32 %v1167, %v1276
    %v1280 = vxor.u32 %v1279, 2147483648
    %v1281 = vmul.f32 %v1280, 1.442695
    %v1282 = vpow.pop %v1281
    %v1283 = vadd.f32 %v1282, 1.0
    %v1284 = vrcp.pop %v1283
    %v1285 = vmul.f32 1.0, %v1284
    %v1286 = vtanh.pop %v1279
    %v1287 = vsel %vm136, %v1285, %v1286
    %v1288 = vmul.f32 %v1287, 0.0
    %1290 = vrot.lane.b32.xlu0 %v1287, 32
    %v1291 = vpop.permute.xlu0 %1290
    %v1293 = vmul.f32 %v1287, %v1291
    %1295 = vrot.lane.b32.xlu0 %v1293, 32
    %v1296 = vpop.permute.xlu0 %1295
    %v1298 = vadd.f32 %v1288, %v1296
    %v1299 = vtanh.pop %v1298
    %1301 = vrot.lane.b32.xlu0 %v1299, 32
    %v1302 = vpop.permute.xlu0 %1301
    %v1304 = vmul.f32 %v1287, %v1302
    %1306 = vrot.lane.b32.xlu0 %v1304, 64
    %v1307 = vpop.permute.xlu0 %1306
    %v1308 = vsel %vm277, %v1307, 0
    %1310 = vmatprep.subr.mxu0 0.0
    %1311 = vmatpush1.msra.mxu0 %v1205
    %1312 = vmatprep.subr.mxu0 0.0
    %1313 = vmatpush1.msra.mxu0 %v1206
    %1314 = vmatprep.subr.mxu0 0.0
    %1315 = vmatpush1.msra.mxu0 %v1207
    %1316 = vmatprep.subr.mxu0 0.0
    %1317 = vmatpush1.msra.mxu0 %v1208
    %1318 = vmatprep.subr.mxu0 0.0
    %1319 = vmatpush1.msra.mxu0 0.0
    %1320 = vmatprep.subr.mxu0 0.0
    %1321 = vmatpush1.msra.mxu0 0.0
    %1322 = vmatprep.subr.mxu0 0.0
    %1323 = vmatpush1.msra.mxu0 0.0
    %1324 = vmatprep.subr.mxu0 0.0
    %1325 = vmatpush1.msra.mxu0 0.0
    %1326 = vmatprep.subr.mxu0 0.0
    %1327 = vmatpush1.msra.mxu0 0.0
    %1328 = vmatprep.subr.mxu0 0.0
    %1329 = vmatpush1.msra.mxu0 0.0
    %1330 = vmatprep.subr.mxu0 0.0
    %1331 = vmatpush1.msra.mxu0 0.0
    %1332 = vmatprep.subr.mxu0 0.0
    %1333 = vmatpush1.msra.mxu0 0.0
    %1334 = vmatprep.subr.mxu0 0.0
    %1335 = vmatpush1.msra.mxu0 0.0
    %1336 = vmatprep.subr.mxu0 0.0
    %1337 = vmatpush1.msra.mxu0 0.0
    %1338 = vmatprep.subr.mxu0 0.0
    %1339 = vmatpush1.msra.mxu0 0.0
    %1340 = vmatprep.subr.mxu0 0.0
    %1341 = vmatpush1.msra.mxu0 0.0
    %1342 = vmatprep.subr.mxu0 0.0
    %1343 = vmatpush1.msra.mxu0 0.0
    %1344 = vmatprep.subr.mxu0 0.0
    %1345 = vmatpush1.msra.mxu0 0.0
    %1346 = vmatprep.subr.mxu0 0.0
    %1347 = vmatpush1.msra.mxu0 0.0
    %1348 = vmatprep.subr.mxu0 0.0
    %1349 = vmatpush1.msra.mxu0 0.0
    %1350 = vmatprep.subr.mxu0 0.0
    %1351 = vmatpush1.msra.mxu0 0.0
    %1352 = vmatprep.subr.mxu0 0.0
    %1353 = vmatpush1.msra.mxu0 0.0
    %1354 = vmatprep.subr.mxu0 0.0
    %1355 = vmatpush1.msra.mxu0 0.0
    %1356 = vmatprep.subr.mxu0 0.0
    %1357 = vmatpush1.msra.mxu0 0.0
    %1358 = vmatprep.subr.mxu0 0.0
    %1359 = vmatpush1.msra.mxu0 0.0
    %1360 = vmatprep.subr.mxu0 0.0
    %1361 = vmatpush1.msra.mxu0 0.0
    %1362 = vmatprep.subr.mxu0 0.0
    %1363 = vmatpush1.msra.mxu0 0.0
    %1364 = vmatprep.subr.mxu0 0.0
    %1365 = vmatpush1.msra.mxu0 0.0
    %1366 = vmatprep.subr.mxu0 0.0
    %1367 = vmatpush1.msra.mxu0 0.0
    %1368 = vmatprep.subr.mxu0 0.0
    %1369 = vmatpush1.msra.mxu0 0.0
    %1370 = vmatprep.subr.mxu0 0.0
    %1371 = vmatpush1.msra.mxu0 0.0
    %1372 = vmatprep.subr.mxu0 0.0
    %1373 = vmatpush1.msra.mxu0 0.0
    %1374 = vmatprep.mubr.f32.mxu0 0.0
    %1375 = vmatmul.mubr.f32.gmra.mrb[0].mxu0 %v1308
    %v1376 = vpop.f32.mrb[0].mxu0
    %v1377 = vadd.f32 0.0, %v1376
    %v1378 = vpop.f32.mrb[0].mxu0
    %1379 = vdwg.mxu0
    %v1380 = vadd.f32 %v1172, %v1377
    %v1381 = vxor.u32 %v1380, 2147483648
    %v1382 = vmul.f32 %v1381, 1.442695
    %v1383 = vpow.pop %v1382
    %v1384 = vadd.f32 %v1383, 1.0
    %v1385 = vrcp.pop %v1384
    %v1386 = vmul.f32 1.0, %v1385
    %v1387 = vtanh.pop %v1380
    %v1388 = vsel %vm136, %v1386, %v1387
    %v1389 = vmul.f32 %v1388, %v1298
    %1391 = vrot.lane.b32.xlu0 %v1388, 32
    %v1392 = vpop.permute.xlu0 %1391
    %v1394 = vmul.f32 %v1388, %v1392
    %1396 = vrot.lane.b32.xlu0 %v1394, 32
    %v1397 = vpop.permute.xlu0 %1396
    %v1399 = vadd.f32 %v1389, %v1397
    %v1400 = vtanh.pop %v1399
    %1402 = vrot.lane.b32.xlu0 %v1400, 32
    %v1403 = vpop.permute.xlu0 %1402
    %v1405 = vmul.f32 %v1388, %v1403
    %1407 = vrot.lane.b32.xlu0 %v1405, 64
    %v1408 = vpop.permute.xlu0 %1407
    %v1409 = vsel %vm277, %v1408, 0
    %1411 = vmatprep.subr.mxu0 0.0
    %1412 = vmatpush1.msra.mxu0 %v1205
    %1413 = vmatprep.subr.mxu0 0.0
    %1414 = vmatpush1.msra.mxu0 %v1206
    %1415 = vmatprep.subr.mxu0 0.0
    %1416 = vmatpush1.msra.mxu0 %v1207
    %1417 = vmatprep.subr.mxu0 0.0
    %1418 = vmatpush1.msra.mxu0 %v1208
    %1419 = vmatprep.subr.mxu0 0.0
    %1420 = vmatpush1.msra.mxu0 0.0
    %1421 = vmatprep.subr.mxu0 0.0
    %1422 = vmatpush1.msra.mxu0 0.0
    %1423 = vmatprep.subr.mxu0 0.0
    %1424 = vmatpush1.msra.mxu0 0.0
    %1425 = vmatprep.subr.mxu0 0.0
    %1426 = vmatpush1.msra.mxu0 0.0
    %1427 = vmatprep.subr.mxu0 0.0
    %1428 = vmatpush1.msra.mxu0 0.0
    %1429 = vmatprep.subr.mxu0 0.0
    %1430 = vmatpush1.msra.mxu0 0.0
    %1431 = vmatprep.subr.mxu0 0.0
    %1432 = vmatpush1.msra.mxu0 0.0
    %1433 = vmatprep.subr.mxu0 0.0
    %1434 = vmatpush1.msra.mxu0 0.0
    %1435 = vmatprep.subr.mxu0 0.0
    %1436 = vmatpush1.msra.mxu0 0.0
    %1437 = vmatprep.subr.mxu0 0.0
    %1438 = vmatpush1.msra.mxu0 0.0
    %1439 = vmatprep.subr.mxu0 0.0
    %1440 = vmatpush1.msra.mxu0 0.0
    %1441 = vmatprep.subr.mxu0 0.0
    %1442 = vmatpush1.msra.mxu0 0.0
    %1443 = vmatprep.subr.mxu0 0.0
    %1444 = vmatpush1.msra.mxu0 0.0
    %1445 = vmatprep.subr.mxu0 0.0
    %1446 = vmatpush1.msra.mxu0 0.0
    %1447 = vmatprep.subr.mxu0 0.0
    %1448 = vmatpush1.msra.mxu0 0.0
    %1449 = vmatprep.subr.mxu0 0.0
    %1450 = vmatpush1.msra.mxu0 0.0
    %1451 = vmatprep.subr.mxu0 0.0
    %1452 = vmatpush1.msra.mxu0 0.0
    %1453 = vmatprep.subr.mxu0 0.0
    %1454 = vmatpush1.msra.mxu0 0.0
    %1455 = vmatprep.subr.mxu0 0.0
    %1456 = vmatpush1.msra.mxu0 0.0
    %1457 = vmatprep.subr.mxu0 0.0
    %1458 = vmatpush1.msra.mxu0 0.0
    %1459 = vmatprep.subr.mxu0 0.0
    %1460 = vmatpush1.msra.mxu0 0.0
    %1461 = vmatprep.subr.mxu0 0.0
    %1462 = vmatpush1.msra.mxu0 0.0
    %1463 = vmatprep.subr.mxu0 0.0
    %1464 = vmatpush1.msra.mxu0 0.0
    %1465 = vmatprep.subr.mxu0 0.0
    %1466 = vmatpush1.msra.mxu0 0.0
    %1467 = vmatprep.subr.mxu0 0.0
    %1468 = vmatpush1.msra.mxu0 0.0
    %1469 = vmatprep.subr.mxu0 0.0
    %1470 = vmatpush1.msra.mxu0 0.0
    %1471 = vmatprep.subr.mxu0 0.0
    %1472 = vmatpush1.msra.mxu0 0.0
    %1473 = vmatprep.subr.mxu0 0.0
    %1474 = vmatpush1.msra.mxu0 0.0
    %1475 = vmatprep.mubr.f32.mxu0 0.0
    %1476 = vmatmul.mubr.f32.gmra.mrb[0].mxu0 %v1409
    %v1477 = vpop.f32.mrb[0].mxu0
    %v1478 = vadd.f32 0.0, %v1477
    %v1479 = vpop.f32.mrb[0].mxu0
    %1480 = vdwg.mxu0
    %v1481 = vadd.f32 %v1177, %v1478
    %v1482 = vxor.u32 %v1481, 2147483648
    %v1483 = vmul.f32 %v1482, 1.442695
    %v1484 = vpow.pop %v1483
    %v1485 = vadd.f32 %v1484, 1.0
    %v1486 = vrcp.pop %v1485
    %v1487 = vmul.f32 1.0, %v1486
    %v1488 = vtanh.pop %v1481
    %v1489 = vsel %vm136, %v1487, %v1488
    %v1490 = vmul.f32 %v1489, %v1399
    %1492 = vrot.lane.b32.xlu0 %v1489, 32
    %v1493 = vpop.permute.xlu0 %1492
    %v1495 = vmul.f32 %v1489, %v1493
    %1497 = vrot.lane.b32.xlu0 %v1495, 32
    %v1498 = vpop.permute.xlu0 %1497
    %v1500 = vadd.f32 %v1490, %v1498
    %v1501 = vtanh.pop %v1500
    %1503 = vrot.lane.b32.xlu0 %v1501, 32
    %v1504 = vpop.permute.xlu0 %1503
    %v1506 = vmul.f32 %v1489, %v1504
    %1508 = vrot.lane.b32.xlu0 %v1506, 64
    %v1509 = vpop.permute.xlu0 %1508
    %v1510 = vsel %vm277, %v1509, 0
    %1512 = vmatprep.subr.mxu0 0.0
    %1513 = vmatpush1.msra.mxu0 %v1205
    %1514 = vmatprep.subr.mxu0 0.0
    %1515 = vmatpush1.msra.mxu0 %v1206
    %1516 = vmatprep.subr.mxu0 0.0
    %1517 = vmatpush1.msra.mxu0 %v1207
    %1518 = vmatprep.subr.mxu0 0.0
    %1519 = vmatpush1.msra.mxu0 %v1208
    %1520 = vmatprep.subr.mxu0 0.0
    %1521 = vmatpush1.msra.mxu0 0.0
    %1522 = vmatprep.subr.mxu0 0.0
    %1523 = vmatpush1.msra.mxu0 0.0
    %1524 = vmatprep.subr.mxu0 0.0
    %1525 = vmatpush1.msra.mxu0 0.0
    %1526 = vmatprep.subr.mxu0 0.0
    %1527 = vmatpush1.msra.mxu0 0.0
    %1528 = vmatprep.subr.mxu0 0.0
    %1529 = vmatpush1.msra.mxu0 0.0
    %1530 = vmatprep.subr.mxu0 0.0
    %1531 = vmatpush1.msra.mxu0 0.0
    %1532 = vmatprep.subr.mxu0 0.0
    %1533 = vmatpush1.msra.mxu0 0.0
    %1534 = vmatprep.subr.mxu0 0.0
    %1535 = vmatpush1.msra.mxu0 0.0
    %1536 = vmatprep.subr.mxu0 0.0
    %1537 = vmatpush1.msra.mxu0 0.0
    %1538 = vmatprep.subr.mxu0 0.0
    %1539 = vmatpush1.msra.mxu0 0.0
    %1540 = vmatprep.subr.mxu0 0.0
    %1541 = vmatpush1.msra.mxu0 0.0
    %1542 = vmatprep.subr.mxu0 0.0
    %1543 = vmatpush1.msra.mxu0 0.0
    %1544 = vmatprep.subr.mxu0 0.0
    %1545 = vmatpush1.msra.mxu0 0.0
    %1546 = vmatprep.subr.mxu0 0.0
    %1547 = vmatpush1.msra.mxu0 0.0
    %1548 = vmatprep.subr.mxu0 0.0
    %1549 = vmatpush1.msra.mxu0 0.0
    %1550 = vmatprep.subr.mxu0 0.0
    %1551 = vmatpush1.msra.mxu0 0.0
    %1552 = vmatprep.subr.mxu0 0.0
    %1553 = vmatpush1.msra.mxu0 0.0
    %1554 = vmatprep.subr.mxu0 0.0
    %1555 = vmatpush1.msra.mxu0 0.0
    %1556 = vmatprep.subr.mxu0 0.0
    %1557 = vmatpush1.msra.mxu0 0.0
    %1558 = vmatprep.subr.mxu0 0.0
    %1559 = vmatpush1.msra.mxu0 0.0
    %1560 = vmatprep.subr.mxu0 0.0
    %1561 = vmatpush1.msra.mxu0 0.0
    %1562 = vmatprep.subr.mxu0 0.0
    %1563 = vmatpush1.msra.mxu0 0.0
    %1564 = vmatprep.subr.mxu0 0.0
    %1565 = vmatpush1.msra.mxu0 0.0
    %1566 = vmatprep.subr.mxu0 0.0
    %1567 = vmatpush1.msra.mxu0 0.0
    %1568 = vmatprep.subr.mxu0 0.0
    %1569 = vmatpush1.msra.mxu0 0.0
    %1570 = vmatprep.subr.mxu0 0.0
    %1571 = vmatpush1.msra.mxu0 0.0
    %1572 = vmatprep.subr.mxu0 0.0
    %1573 = vmatpush1.msra.mxu0 0.0
    %1574 = vmatprep.subr.mxu0 0.0
    %1575 = vmatpush1.msra.mxu0 0.0
    %1576 = vmatprep.mubr.f32.mxu0 0.0
    %1577 = vmatmul.mubr.f32.gmra.mrb[0].mxu0 %v1510
    %v1578 = vpop.f32.mrb[0].mxu0
    %v1579 = vadd.f32 0.0, %v1578
    %v1580 = vpop.f32.mrb[0].mxu0
    %1581 = vdwg.mxu0
    %v1582 = vadd.f32 %v1182, %v1579
    %v1583 = vxor.u32 %v1582, 2147483648
    %v1584 = vmul.f32 %v1583, 1.442695
    %v1585 = vpow.pop %v1584
    %v1586 = vadd.f32 %v1585, 1.0
    %v1587 = vrcp.pop %v1586
    %v1588 = vmul.f32 1.0, %v1587
    %v1589 = vtanh.pop %v1582
    %v1590 = vsel %vm136, %v1588, %v1589
    %v1591 = vmul.f32 %v1590, %v1500
    %1593 = vrot.lane.b32.xlu0 %v1590, 32
    %v1594 = vpop.permute.xlu0 %1593
    %v1596 = vmul.f32 %v1590, %v1594
    %1598 = vrot.lane.b32.xlu0 %v1596, 32
    %v1599 = vpop.permute.xlu0 %1598
    %v1601 = vadd.f32 %v1591, %v1599
    %v1602 = vtanh.pop %v1601
    %1604 = vrot.lane.b32.xlu0 %v1602, 32
    %v1605 = vpop.permute.xlu0 %1604
    %v1607 = vmul.f32 %v1590, %v1605
    %1609 = vrot.lane.b32.xlu0 %v1607, 64
    %v1610 = vpop.permute.xlu0 %1609
    %v1611 = vsel %vm277, %v1610, 0
    %1613 = vmatprep.subr.mxu0 0.0
    %1614 = vmatpush1.msra.mxu0 %v1205
    %1615 = vmatprep.subr.mxu0 0.0
    %1616 = vmatpush1.msra.mxu0 %v1206
    %1617 = vmatprep.subr.mxu0 0.0
    %1618 = vmatpush1.msra.mxu0 %v1207
    %1619 = vmatprep.subr.mxu0 0.0
    %1620 = vmatpush1.msra.mxu0 %v1208
    %1621 = vmatprep.subr.mxu0 0.0
    %1622 = vmatpush1.msra.mxu0 0.0
    %1623 = vmatprep.subr.mxu0 0.0
    %1624 = vmatpush1.msra.mxu0 0.0
    %1625 = vmatprep.subr.mxu0 0.0
    %1626 = vmatpush1.msra.mxu0 0.0
    %1627 = vmatprep.subr.mxu0 0.0
    %1628 = vmatpush1.msra.mxu0 0.0
    %1629 = vmatprep.subr.mxu0 0.0
    %1630 = vmatpush1.msra.mxu0 0.0
    %1631 = vmatprep.subr.mxu0 0.0
    %1632 = vmatpush1.msra.mxu0 0.0
    %1633 = vmatprep.subr.mxu0 0.0
    %1634 = vmatpush1.msra.mxu0 0.0
    %1635 = vmatprep.subr.mxu0 0.0
    %1636 = vmatpush1.msra.mxu0 0.0
    %1637 = vmatprep.subr.mxu0 0.0
    %1638 = vmatpush1.msra.mxu0 0.0
    %1639 = vmatprep.subr.mxu0 0.0
    %1640 = vmatpush1.msra.mxu0 0.0
    %1641 = vmatprep.subr.mxu0 0.0
    %1642 = vmatpush1.msra.mxu0 0.0
    %1643 = vmatprep.subr.mxu0 0.0
    %1644 = vmatpush1.msra.mxu0 0.0
    %1645 = vmatprep.subr.mxu0 0.0
    %1646 = vmatpush1.msra.mxu0 0.0
    %1647 = vmatprep.subr.mxu0 0.0
    %1648 = vmatpush1.msra.mxu0 0.0
    %1649 = vmatprep.subr.mxu0 0.0
    %1650 = vmatpush1.msra.mxu0 0.0
    %1651 = vmatprep.subr.mxu0 0.0
    %1652 = vmatpush1.msra.mxu0 0.0
    %1653 = vmatprep.subr.mxu0 0.0
    %1654 = vmatpush1.msra.mxu0 0.0
    %1655 = vmatprep.subr.mxu0 0.0
    %1656 = vmatpush1.msra.mxu0 0.0
    %1657 = vmatprep.subr.mxu0 0.0
    %1658 = vmatpush1.msra.mxu0 0.0
    %1659 = vmatprep.subr.mxu0 0.0
    %1660 = vmatpush1.msra.mxu0 0.0
    %1661 = vmatprep.subr.mxu0 0.0
    %1662 = vmatpush1.msra.mxu0 0.0
    %1663 = vmatprep.subr.mxu0 0.0
    %1664 = vmatpush1.msra.mxu0 0.0
    %1665 = vmatprep.subr.mxu0 0.0
    %1666 = vmatpush1.msra.mxu0 0.0
    %1667 = vmatprep.subr.mxu0 0.0
    %1668 = vmatpush1.msra.mxu0 0.0
    %1669 = vmatprep.subr.mxu0 0.0
    %1670 = vmatpush1.msra.mxu0 0.0
    %1671 = vmatprep.subr.mxu0 0.0
    %1672 = vmatpush1.msra.mxu0 0.0
    %1673 = vmatprep.subr.mxu0 0.0
    %1674 = vmatpush1.msra.mxu0 0.0
    %1675 = vmatprep.subr.mxu0 0.0
    %1676 = vmatpush1.msra.mxu0 0.0
    %1677 = vmatprep.mubr.f32.mxu0 0.0
    %1678 = vmatmul.mubr.f32.gmra.mrb[0].mxu0 %v1611
    %v1679 = vpop.f32.mrb[0].mxu0
    %v1680 = vadd.f32 0.0, %v1679
    %v1681 = vpop.f32.mrb[0].mxu0
    %1682 = vdwg.mxu0
    %v1683 = vadd.f32 %v1187, %v1680
    %v1684 = vxor.u32 %v1683, 2147483648
    %v1685 = vmul.f32 %v1684, 1.442695
    %v1686 = vpow.pop %v1685
    %v1687 = vadd.f32 %v1686, 1.0
    %v1688 = vrcp.pop %v1687
    %v1689 = vmul.f32 1.0, %v1688
    %v1690 = vtanh.pop %v1683
    %v1691 = vsel %vm136, %v1689, %v1690
    %v1692 = vmul.f32 %v1691, %v1601
    %1694 = vrot.lane.b32.xlu0 %v1691, 32
    %v1695 = vpop.permute.xlu0 %1694
    %v1697 = vmul.f32 %v1691, %v1695
    %1699 = vrot.lane.b32.xlu0 %v1697, 32
    %v1700 = vpop.permute.xlu0 %1699
    %v1702 = vadd.f32 %v1692, %v1700
    %v1703 = vtanh.pop %v1702
    %1705 = vrot.lane.b32.xlu0 %v1703, 32
    %v1706 = vpop.permute.xlu0 %1705
    %v1708 = vmul.f32 %v1691, %v1706
    %1710 = vrot.lane.b32.xlu0 %v1708, 64
    %v1711 = vpop.permute.xlu0 %1710
    %v1712 = vsel %vm277, %v1711, 0
    %1714 = vmatprep.subr.mxu0 0.0
    %1715 = vmatpush1.msra.mxu0 %v1205
    %1716 = vmatprep.subr.mxu0 0.0
    %1717 = vmatpush1.msra.mxu0 %v1206
    %1718 = vmatprep.subr.mxu0 0.0
    %1719 = vmatpush1.msra.mxu0 %v1207
    %1720 = vmatprep.subr.mxu0 0.0
    %1721 = vmatpush1.msra.mxu0 %v1208
    %1722 = vmatprep.subr.mxu0 0.0
    %1723 = vmatpush1.msra.mxu0 0.0
    %1724 = vmatprep.subr.mxu0 0.0
    %1725 = vmatpush1.msra.mxu0 0.0
    %1726 = vmatprep.subr.mxu0 0.0
    %1727 = vmatpush1.msra.mxu0 0.0
    %1728 = vmatprep.subr.mxu0 0.0
    %1729 = vmatpush1.msra.mxu0 0.0
    %1730 = vmatprep.subr.mxu0 0.0
    %1731 = vmatpush1.msra.mxu0 0.0
    %1732 = vmatprep.subr.mxu0 0.0
    %1733 = vmatpush1.msra.mxu0 0.0
    %1734 = vmatprep.subr.mxu0 0.0
    %1735 = vmatpush1.msra.mxu0 0.0
    %1736 = vmatprep.subr.mxu0 0.0
    %1737 = vmatpush1.msra.mxu0 0.0
    %1738 = vmatprep.subr.mxu0 0.0
    %1739 = vmatpush1.msra.mxu0 0.0
    %1740 = vmatprep.subr.mxu0 0.0
    %1741 = vmatpush1.msra.mxu0 0.0
    %1742 = vmatprep.subr.mxu0 0.0
    %1743 = vmatpush1.msra.mxu0 0.0
    %1744 = vmatprep.subr.mxu0 0.0
    %1745 = vmatpush1.msra.mxu0 0.0
    %1746 = vmatprep.subr.mxu0 0.0
    %1747 = vmatpush1.msra.mxu0 0.0
    %1748 = vmatprep.subr.mxu0 0.0
    %1749 = vmatpush1.msra.mxu0 0.0
    %1750 = vmatprep.subr.mxu0 0.0
    %1751 = vmatpush1.msra.mxu0 0.0
    %1752 = vmatprep.subr.mxu0 0.0
    %1753 = vmatpush1.msra.mxu0 0.0
    %1754 = vmatprep.subr.mxu0 0.0
    %1755 = vmatpush1.msra.mxu0 0.0
    %1756 = vmatprep.subr.mxu0 0.0
    %1757 = vmatpush1.msra.mxu0 0.0
    %1758 = vmatprep.subr.mxu0 0.0
    %1759 = vmatpush1.msra.mxu0 0.0
    %1760 = vmatprep.subr.mxu0 0.0
    %1761 = vmatpush1.msra.mxu0 0.0
    %1762 = vmatprep.subr.mxu0 0.0
    %1763 = vmatpush1.msra.mxu0 0.0
    %1764 = vmatprep.subr.mxu0 0.0
    %1765 = vmatpush1.msra.mxu0 0.0
    %1766 = vmatprep.subr.mxu0 0.0
    %1767 = vmatpush1.msra.mxu0 0.0
    %1768 = vmatprep.subr.mxu0 0.0
    %1769 = vmatpush1.msra.mxu0 0.0
    %1770 = vmatprep.subr.mxu0 0.0
    %1771 = vmatpush1.msra.mxu0 0.0
    %1772 = vmatprep.subr.mxu0 0.0
    %1773 = vmatpush1.msra.mxu0 0.0
    %1774 = vmatprep.subr.mxu0 0.0
    %1775 = vmatpush1.msra.mxu0 0.0
    %1776 = vmatprep.subr.mxu0 0.0
    %1777 = vmatpush1.msra.mxu0 0.0
    %1778 = vmatprep.mubr.f32.mxu0 0.0
    %1779 = vmatmul.mubr.f32.gmra.mrb[0].mxu0 %v1712
    %v1780 = vpop.f32.mrb[0].mxu0
    %v1781 = vadd.f32 0.0, %v1780
    %v1782 = vpop.f32.mrb[0].mxu0
    %1783 = vdwg.mxu0
    %v1784 = vadd.f32 %v1192, %v1781
    %v1785 = vxor.u32 %v1784, 2147483648
    %v1786 = vmul.f32 %v1785, 1.442695
    %v1787 = vpow.pop %v1786
    %v1788 = vadd.f32 %v1787, 1.0
    %v1789 = vrcp.pop %v1788
    %v1790 = vmul.f32 1.0, %v1789
    %v1791 = vtanh.pop %v1784
    %v1792 = vsel %vm136, %v1790, %v1791
    %v1793 = vmul.f32 %v1792, %v1702
    %1795 = vrot.lane.b32.xlu0 %v1792, 32
    %v1796 = vpop.permute.xlu0 %1795
    %v1798 = vmul.f32 %v1792, %v1796
    %1800 = vrot.lane.b32.xlu0 %v1798, 32
    %v1801 = vpop.permute.xlu0 %1800
    %v1803 = vadd.f32 %v1793, %v1801
    %v1804 = vtanh.pop %v1803
    %1806 = vrot.lane.b32.xlu0 %v1804, 32
    %v1807 = vpop.permute.xlu0 %1806
    %v1809 = vmul.f32 %v1792, %v1807
    %1811 = vrot.lane.b32.xlu0 %v1809, 64
    %v1812 = vpop.permute.xlu0 %1811
    %v1813 = vsel %vm277, %v1812, 0
    %1815 = vmatprep.subr.mxu0 0.0
    %1816 = vmatpush1.msra.mxu0 %v1205
    %1817 = vmatprep.subr.mxu0 0.0
    %1818 = vmatpush1.msra.mxu0 %v1206
    %1819 = vmatprep.subr.mxu0 0.0
    %1820 = vmatpush1.msra.mxu0 %v1207
    %1821 = vmatprep.subr.mxu0 0.0
    %1822 = vmatpush1.msra.mxu0 %v1208
    %1823 = vmatprep.subr.mxu0 0.0
    %1824 = vmatpush1.msra.mxu0 0.0
    %1825 = vmatprep.subr.mxu0 0.0
    %1826 = vmatpush1.msra.mxu0 0.0
    %1827 = vmatprep.subr.mxu0 0.0
    %1828 = vmatpush1.msra.mxu0 0.0
    %1829 = vmatprep.subr.mxu0 0.0
    %1830 = vmatpush1.msra.mxu0 0.0
    %1831 = vmatprep.subr.mxu0 0.0
    %1832 = vmatpush1.msra.mxu0 0.0
    %1833 = vmatprep.subr.mxu0 0.0
    %1834 = vmatpush1.msra.mxu0 0.0
    %1835 = vmatprep.subr.mxu0 0.0
    %1836 = vmatpush1.msra.mxu0 0.0
    %1837 = vmatprep.subr.mxu0 0.0
    %1838 = vmatpush1.msra.mxu0 0.0
    %1839 = vmatprep.subr.mxu0 0.0
    %1840 = vmatpush1.msra.mxu0 0.0
    %1841 = vmatprep.subr.mxu0 0.0
    %1842 = vmatpush1.msra.mxu0 0.0
    %1843 = vmatprep.subr.mxu0 0.0
    %1844 = vmatpush1.msra.mxu0 0.0
    %1845 = vmatprep.subr.mxu0 0.0
    %1846 = vmatpush1.msra.mxu0 0.0
    %1847 = vmatprep.subr.mxu0 0.0
    %1848 = vmatpush1.msra.mxu0 0.0
    %1849 = vmatprep.subr.mxu0 0.0
    %1850 = vmatpush1.msra.mxu0 0.0
    %1851 = vmatprep.subr.mxu0 0.0
    %1852 = vmatpush1.msra.mxu0 0.0
    %1853 = vmatprep.subr.mxu0 0.0
    %1854 = vmatpush1.msra.mxu0 0.0
    %1855 = vmatprep.subr.mxu0 0.0
    %1856 = vmatpush1.msra.mxu0 0.0
    %1857 = vmatprep.subr.mxu0 0.0
    %1858 = vmatpush1.msra.mxu0 0.0
    %1859 = vmatprep.subr.mxu0 0.0
    %1860 = vmatpush1.msra.mxu0 0.0
    %1861 = vmatprep.subr.mxu0 0.0
    %1862 = vmatpush1.msra.mxu0 0.0
    %1863 = vmatprep.subr.mxu0 0.0
    %1864 = vmatpush1.msra.mxu0 0.0
    %1865 = vmatprep.subr.mxu0 0.0
    %1866 = vmatpush1.msra.mxu0 0.0
    %1867 = vmatprep.subr.mxu0 0.0
    %1868 = vmatpush1.msra.mxu0 0.0
    %1869 = vmatprep.subr.mxu0 0.0
    %1870 = vmatpush1.msra.mxu0 0.0
    %1871 = vmatprep.subr.mxu0 0.0
    %1872 = vmatpush1.msra.mxu0 0.0
    %1873 = vmatprep.subr.mxu0 0.0
    %1874 = vmatpush1.msra.mxu0 0.0
    %1875 = vmatprep.subr.mxu0 0.0
    %1876 = vmatpush1.msra.mxu0 0.0
    %1877 = vmatprep.subr.mxu0 0.0
    %1878 = vmatpush1.msra.mxu0 0.0
    %1879 = vmatprep.mubr.f32.mxu0 0.0
    %1880 = vmatmul.mubr.f32.gmra.mrb[0].mxu0 %v1813
    %v1881 = vpop.f32.mrb[0].mxu0
    %v1882 = vadd.f32 0.0, %v1881
    %v1883 = vpop.f32.mrb[0].mxu0
    %1884 = vdwg.mxu0
    %v1885 = vadd.f32 %v1197, %v1882
    %v1886 = vxor.u32 %v1885, 2147483648
    %v1887 = vmul.f32 %v1886, 1.442695
    %v1888 = vpow.pop %v1887
    %v1889 = vadd.f32 %v1888, 1.0
    %v1890 = vrcp.pop %v1889
    %v1891 = vmul.f32 1.0, %v1890
    %v1892 = vtanh.pop %v1885
    %v1893 = vsel %vm136, %v1891, %v1892
    %v1894 = vmul.f32 %v1893, %v1803
    %1896 = vrot.lane.b32.xlu0 %v1893, 32
    %v1897 = vpop.permute.xlu0 %1896
    %v1899 = vmul.f32 %v1893, %v1897
    %1901 = vrot.lane.b32.xlu0 %v1899, 32
    %v1902 = vpop.permute.xlu0 %1901
    %v1904 = vadd.f32 %v1894, %v1902
    %v1905 = vtanh.pop %v1904
    %1907 = vrot.lane.b32.xlu0 %v1905, 32
    %v1908 = vpop.permute.xlu0 %1907
    %v1910 = vmul.f32 %v1893, %v1908
    %1912 = vrot.lane.b32.xlu0 %v1910, 64
    %v1913 = vpop.permute.xlu0 %1912
    %v1914 = vsel %vm277, %v1913, 0
    %1916 = vmatprep.subr.mxu0 0.0
    %1917 = vmatpush1.msra.mxu0 %v1205
    %1918 = vmatprep.subr.mxu0 0.0
    %1919 = vmatpush1.msra.mxu0 %v1206
    %1920 = vmatprep.subr.mxu0 0.0
    %1921 = vmatpush1.msra.mxu0 %v1207
    %1922 = vmatprep.subr.mxu0 0.0
    %1923 = vmatpush1.msra.mxu0 %v1208
    %1924 = vmatprep.subr.mxu0 0.0
    %1925 = vmatpush1.msra.mxu0 0.0
    %1926 = vmatprep.subr.mxu0 0.0
    %1927 = vmatpush1.msra.mxu0 0.0
    %1928 = vmatprep.subr.mxu0 0.0
    %1929 = vmatpush1.msra.mxu0 0.0
    %1930 = vmatprep.subr.mxu0 0.0
    %1931 = vmatpush1.msra.mxu0 0.0
    %1932 = vmatprep.subr.mxu0 0.0
    %1933 = vmatpush1.msra.mxu0 0.0
    %1934 = vmatprep.subr.mxu0 0.0
    %1935 = vmatpush1.msra.mxu0 0.0
    %1936 = vmatprep.subr.mxu0 0.0
    %1937 = vmatpush1.msra.mxu0 0.0
    %1938 = vmatprep.subr.mxu0 0.0
    %1939 = vmatpush1.msra.mxu0 0.0
    %1940 = vmatprep.subr.mxu0 0.0
    %1941 = vmatpush1.msra.mxu0 0.0
    %1942 = vmatprep.subr.mxu0 0.0
    %1943 = vmatpush1.msra.mxu0 0.0
    %1944 = vmatprep.subr.mxu0 0.0
    %1945 = vmatpush1.msra.mxu0 0.0
    %1946 = vmatprep.subr.mxu0 0.0
    %1947 = vmatpush1.msra.mxu0 0.0
    %1948 = vmatprep.subr.mxu0 0.0
    %1949 = vmatpush1.msra.mxu0 0.0
    %1950 = vmatprep.subr.mxu0 0.0
    %1951 = vmatpush1.msra.mxu0 0.0
    %1952 = vmatprep.subr.mxu0 0.0
    %1953 = vmatpush1.msra.mxu0 0.0
    %1954 = vmatprep.subr.mxu0 0.0
    %1955 = vmatpush1.msra.mxu0 0.0
    %1956 = vmatprep.subr.mxu0 0.0
    %1957 = vmatpush1.msra.mxu0 0.0
    %1958 = vmatprep.subr.mxu0 0.0
    %1959 = vmatpush1.msra.mxu0 0.0
    %1960 = vmatprep.subr.mxu0 0.0
    %1961 = vmatpush1.msra.mxu0 0.0
    %1962 = vmatprep.subr.mxu0 0.0
    %1963 = vmatpush1.msra.mxu0 0.0
    %1964 = vmatprep.subr.mxu0 0.0
    %1965 = vmatpush1.msra.mxu0 0.0
    %1966 = vmatprep.subr.mxu0 0.0
    %1967 = vmatpush1.msra.mxu0 0.0
    %1968 = vmatprep.subr.mxu0 0.0
    %1969 = vmatpush1.msra.mxu0 0.0
    %1970 = vmatprep.subr.mxu0 0.0
    %1971 = vmatpush1.msra.mxu0 0.0
    %1972 = vmatprep.subr.mxu0 0.0
    %1973 = vmatpush1.msra.mxu0 0.0
    %1974 = vmatprep.subr.mxu0 0.0
    %1975 = vmatpush1.msra.mxu0 0.0
    %1976 = vmatprep.subr.mxu0 0.0
    %1977 = vmatpush1.msra.mxu0 0.0
    %1978 = vmatprep.subr.mxu0 0.0
    %1979 = vmatpush1.msra.mxu0 0.0
    %1980 = vmatprep.mubr.f32.mxu0 0.0
    %1981 = vmatmul.mubr.f32.gmra.mrb[0].mxu0 %v1914
    %v1982 = vpop.f32.mrb[0].mxu0
    %v1983 = vadd.f32 0.0, %v1982
    %v1984 = vpop.f32.mrb[0].mxu0
    %1985 = vdwg.mxu0
    %v1986 = vadd.f32 %v1202, %v1983
    %v1987 = vxor.u32 %v1986, 2147483648
    %v1988 = vmul.f32 %v1987, 1.442695
    %v1989 = vpow.pop %v1988
    %v1990 = vadd.f32 %v1989, 1.0
    %v1991 = vrcp.pop %v1990
    %v1992 = vmul.f32 1.0, %v1991
    %v1993 = vtanh.pop %v1986
    %v1994 = vsel %vm136, %v1992, %v1993
    %v1995 = vmul.f32 %v1994, %v1904
    %1997 = vrot.lane.b32.xlu0 %v1994, 32
    %v1998 = vpop.permute.xlu0 %1997
    %v2000 = vmul.f32 %v1994, %v1998
    %2002 = vrot.lane.b32.xlu0 %v2000, 32
    %v2003 = vpop.permute.xlu0 %2002
    %v2005 = vadd.f32 %v1995, %v2003
    %v2006 = vtanh.pop %v2005
    %2008 = vrot.lane.b32.xlu0 %v2006, 32
    %v2009 = vpop.permute.xlu0 %2008
    %v2011 = vmul.f32 %v1994, %v2009
    %2013 = vrot.lane.b32.xlu0 %v1405, 96
    %v2014 = vpop.permute.xlu0 %2013
    %2016 = vrot.lane.b32.xlu0 %v1607, 32
    %v2017 = vpop.permute.xlu0 %2016
    %2020 = vrot.lane.b32.xlu0 %v1809, 96
    %v2021 = vpop.permute.xlu0 %2020
    %2024 = vrot.lane.b32.xlu0 %v2011, 32
    %v2025 = vpop.permute.xlu0 %2024
    %v2027 = vsel %vm277, %v1307, %v2014
    %vm2028 = vcmask 523264
    %v2029 = vsel %vm2028, %v2027, %v1506
    %vm2030 = vcmask 785408
    %v2031 = vsel %vm2030, %v2029, %v2017
    %v2032 = vsel %vm277, %v1711, %v2021
    %v2033 = vsel %vm2028, %v2032, %v1910
    %v2034 = vsel %vm2030, %v2033, %v2025
    %v2035 = vld [vmem:[#allocation11] sm:$0xff]
    %v2036 = vld [vmem:[#allocation11 + $0x8] sm:$0xff]
    %v2037 = vld [vmem:[#allocation11 + $0x10] sm:$0xff]
    %v2038 = vld [vmem:[#allocation11 + $0x18] sm:$0xff]
    %v2039 = vld [vmem:[#allocation11 + $0x20] sm:$0xff]
    %v2040 = vld [vmem:[#allocation11 + $0x28] sm:$0xff]
    %v2041 = vld [vmem:[#allocation11 + $0x30] sm:$0xff]
    %v2042 = vld [vmem:[#allocation11 + $0x38] sm:$0xff]
    %v2043 = vld [vmem:[#allocation11 + $0x40] sm:$0xff]
    %v2044 = vld [vmem:[#allocation11 + $0x48] sm:$0xff]
    %v2045 = vld [vmem:[#allocation11 + $0x50] sm:$0xff]
    %v2046 = vld [vmem:[#allocation11 + $0x58] sm:$0xff]
    %v2047 = vld [vmem:[#allocation11 + $0x60] sm:$0xff]
    %v2048 = vld [vmem:[#allocation11 + $0x68] sm:$0xff]
    %v2049 = vld [vmem:[#allocation11 + $0x70] sm:$0xff]
    %v2050 = vld [vmem:[#allocation11 + $0x78] sm:$0xff]
    %v2051 = vld [vmem:[#allocation11 + $0x80] sm:$0xff]
    %v2052 = vld [vmem:[#allocation11 + $0x88] sm:$0xff]
    %v2053 = vld [vmem:[#allocation11 + $0x90] sm:$0xff]
    %v2054 = vld [vmem:[#allocation11 + $0x98] sm:$0xff]
    %v2055 = vld [vmem:[#allocation11 + $0xa0] sm:$0xff]
    %v2056 = vld [vmem:[#allocation11 + $0xa8] sm:$0xff]
    %v2057 = vld [vmem:[#allocation11 + $0xb0] sm:$0xff]
    %v2058 = vld [vmem:[#allocation11 + $0xb8] sm:$0xff]
    %v2059 = vld [vmem:[#allocation11 + $0xc0] sm:$0xff]
    %v2060 = vld [vmem:[#allocation11 + $0xc8] sm:$0xff]
    %v2061 = vld [vmem:[#allocation11 + $0xd0] sm:$0xff]
    %v2062 = vld [vmem:[#allocation11 + $0xd8] sm:$0xff]
    %v2063 = vld [vmem:[#allocation11 + $0xe0] sm:$0xff]
    %v2064 = vld [vmem:[#allocation11 + $0xe8] sm:$0xff]
    %v2065 = vld [vmem:[#allocation11 + $0xf0] sm:$0xff]
    %v2066 = vld [vmem:[#allocation11 + $0xf8] sm:$0xff]
    %v2067 = vld [vmem:[%s8] sm:$0x1]
    %v2069 = vlaneseq
    %v2070 = vshrl.u32 %v2069, 7
    %v2071 = vsub.s32 0, %v2070
    %v2072 = vrot.slane %v2067, %v2071
    %2074 = vmatprep.subr.mxu0 0.0
    %2075 = vmatpush1.msra.mxu0 %v2035
    %2076 = vmatprep.subr.mxu0 0.0
    %2077 = vmatpush1.msra.mxu0 %v2036
    %2078 = vmatprep.subr.mxu0 0.0
    %2079 = vmatpush1.msra.mxu0 %v2037
    %2080 = vmatprep.subr.mxu0 0.0
    %2081 = vmatpush1.msra.mxu0 %v2038
    %2082 = vmatprep.subr.mxu0 0.0
    %2083 = vmatpush1.msra.mxu0 %v2039
    %2084 = vmatprep.subr.mxu0 0.0
    %2085 = vmatpush1.msra.mxu0 %v2040
    %2086 = vmatprep.subr.mxu0 0.0
    %2087 = vmatpush1.msra.mxu0 %v2041
    %2088 = vmatprep.subr.mxu0 0.0
    %2089 = vmatpush1.msra.mxu0 %v2042
    %2090 = vmatprep.subr.mxu0 0.0
    %2091 = vmatpush1.msra.mxu0 %v2043
    %2092 = vmatprep.subr.mxu0 0.0
    %2093 = vmatpush1.msra.mxu0 %v2044
    %2094 = vmatprep.subr.mxu0 0.0
    %2095 = vmatpush1.msra.mxu0 %v2045
    %2096 = vmatprep.subr.mxu0 0.0
    %2097 = vmatpush1.msra.mxu0 %v2046
    %2098 = vmatprep.subr.mxu0 0.0
    %2099 = vmatpush1.msra.mxu0 %v2047
    %2100 = vmatprep.subr.mxu0 0.0
    %2101 = vmatpush1.msra.mxu0 %v2048
    %2102 = vmatprep.subr.mxu0 0.0
    %2103 = vmatpush1.msra.mxu0 %v2049
    %2104 = vmatprep.subr.mxu0 0.0
    %2105 = vmatpush1.msra.mxu0 %v2050
    %2106 = vmatprep.subr.mxu0 0.0
    %2107 = vmatpush1.msra.mxu0 %v2051
    %2108 = vmatprep.subr.mxu0 0.0
    %2109 = vmatpush1.msra.mxu0 %v2052
    %2110 = vmatprep.subr.mxu0 0.0
    %2111 = vmatpush1.msra.mxu0 %v2053
    %2112 = vmatprep.subr.mxu0 0.0
    %2113 = vmatpush1.msra.mxu0 %v2054
    %2114 = vmatprep.subr.mxu0 0.0
    %2115 = vmatpush1.msra.mxu0 %v2055
    %2116 = vmatprep.subr.mxu0 0.0
    %2117 = vmatpush1.msra.mxu0 %v2056
    %2118 = vmatprep.subr.mxu0 0.0
    %2119 = vmatpush1.msra.mxu0 %v2057
    %2120 = vmatprep.subr.mxu0 0.0
    %2121 = vmatpush1.msra.mxu0 %v2058
    %2122 = vmatprep.subr.mxu0 0.0
    %2123 = vmatpush1.msra.mxu0 %v2059
    %2124 = vmatprep.subr.mxu0 0.0
    %2125 = vmatpush1.msra.mxu0 %v2060
    %2126 = vmatprep.subr.mxu0 0.0
    %2127 = vmatpush1.msra.mxu0 %v2061
    %2128 = vmatprep.subr.mxu0 0.0
    %2129 = vmatpush1.msra.mxu0 %v2062
    %2130 = vmatprep.subr.mxu0 0.0
    %2131 = vmatpush1.msra.mxu0 %v2063
    %2132 = vmatprep.subr.mxu0 0.0
    %2133 = vmatpush1.msra.mxu0 %v2064
    %2134 = vmatprep.subr.mxu0 0.0
    %2135 = vmatpush1.msra.mxu0 %v2065
    %2136 = vmatprep.subr.mxu0 0.0
    %2137 = vmatpush1.msra.mxu0 %v2066
    %2138 = vmatprep.mubr.f32.mxu0 %v2034
    %2139 = vmatmul.mubr.f32.gmra.mrb[0].mxu0 %v2031
    %v2140 = vpop.f32.mrb[0].mxu0
    %v2141 = vadd.f32 %v2072, %v2140
    %v2142 = vpop.f32.mrb[0].mxu0
    %2143 = vdwg.mxu0
    %v2144 = vtanh.pop %v2141
    %v2145 = vld [vmem:[#allocation13] sm:$0xff]
    %v2146 = vld [vmem:[#allocation13 + $0x8] sm:$0xff]
    %v2147 = vld [vmem:[#allocation13 + $0x10] sm:$0xff]
    %v2148 = vld [vmem:[#allocation13 + $0x18] sm:$0xff]
    %v2149 = vld [vmem:[#allocation13 + $0x20] sm:$0xff]
    %v2150 = vld [vmem:[#allocation13 + $0x28] sm:$0xff]
    %v2151 = vld [vmem:[#allocation13 + $0x30] sm:$0xff]
    %v2152 = vld [vmem:[#allocation13 + $0x38] sm:$0xff]
    %v2153 = vld [vmem:[#allocation13 + $0x40] sm:$0xff]
    %v2154 = vld [vmem:[#allocation13 + $0x48] sm:$0xff]
    %v2155 = vld [vmem:[#allocation13 + $0x50] sm:$0xff]
    %v2156 = vld [vmem:[#allocation13 + $0x58] sm:$0xff]
    %v2157 = vld [vmem:[#allocation13 + $0x60] sm:$0xff]
    %v2158 = vld [vmem:[#allocation13 + $0x68] sm:$0xff]
    %v2159 = vld [vmem:[#allocation13 + $0x70] sm:$0xff]
    %v2160 = vld [vmem:[#allocation13 + $0x78] sm:$0xff]
    %v2161 = vld [vmem:[%s10] sm:$0x1]
    %v2163 = vlaneseq
    %v2164 = vshrl.u32 %v2163, 7
    %v2165 = vsub.s32 0, %v2164
    %v2166 = vrot.slane %v2161, %v2165
    %2168 = vmatprep.subr.mxu0 0.0
    %2169 = vmatpush1.msra.mxu0 %v2145
    %2170 = vmatprep.subr.mxu0 0.0
    %2171 = vmatpush1.msra.mxu0 %v2146
    %2172 = vmatprep.subr.mxu0 0.0
    %2173 = vmatpush1.msra.mxu0 %v2147
    %2174 = vmatprep.subr.mxu0 0.0
    %2175 = vmatpush1.msra.mxu0 %v2148
    %2176 = vmatprep.subr.mxu0 0.0
    %2177 = vmatpush1.msra.mxu0 %v2149
    %2178 = vmatprep.subr.mxu0 0.0
    %2179 = vmatpush1.msra.mxu0 %v2150
    %2180 = vmatprep.subr.mxu0 0.0
    %2181 = vmatpush1.msra.mxu0 %v2151
    %2182 = vmatprep.subr.mxu0 0.0
    %2183 = vmatpush1.msra.mxu0 %v2152
    %2184 = vmatprep.subr.mxu0 0.0
    %2185 = vmatpush1.msra.mxu0 %v2153
    %2186 = vmatprep.subr.mxu0 0.0
    %2187 = vmatpush1.msra.mxu0 %v2154
    %2188 = vmatprep.subr.mxu0 0.0
    %2189 = vmatpush1.msra.mxu0 %v2155
    %2190 = vmatprep.subr.mxu0 0.0
    %2191 = vmatpush1.msra.mxu0 %v2156
    %2192 = vmatprep.subr.mxu0 0.0
    %2193 = vmatpush1.msra.mxu0 %v2157
    %2194 = vmatprep.subr.mxu0 0.0
    %2195 = vmatpush1.msra.mxu0 %v2158
    %2196 = vmatprep.subr.mxu0 0.0
    %2197 = vmatpush1.msra.mxu0 %v2159
    %2198 = vmatprep.subr.mxu0 0.0
    %2199 = vmatpush1.msra.mxu0 %v2160
    %2200 = vmatprep.subr.mxu0 0.0
    %2201 = vmatpush1.msra.mxu0 0.0
    %2202 = vmatprep.subr.mxu0 0.0
    %2203 = vmatpush1.msra.mxu0 0.0
    %2204 = vmatprep.subr.mxu0 0.0
    %2205 = vmatpush1.msra.mxu0 0.0
    %2206 = vmatprep.subr.mxu0 0.0
    %2207 = vmatpush1.msra.mxu0 0.0
    %2208 = vmatprep.subr.mxu0 0.0
    %2209 = vmatpush1.msra.mxu0 0.0
    %2210 = vmatprep.subr.mxu0 0.0
    %2211 = vmatpush1.msra.mxu0 0.0
    %2212 = vmatprep.subr.mxu0 0.0
    %2213 = vmatpush1.msra.mxu0 0.0
    %2214 = vmatprep.subr.mxu0 0.0
    %2215 = vmatpush1.msra.mxu0 0.0
    %2216 = vmatprep.subr.mxu0 0.0
    %2217 = vmatpush1.msra.mxu0 0.0
    %2218 = vmatprep.subr.mxu0 0.0
    %2219 = vmatpush1.msra.mxu0 0.0
    %2220 = vmatprep.subr.mxu0 0.0
    %2221 = vmatpush1.msra.mxu0 0.0
    %2222 = vmatprep.subr.mxu0 0.0
    %2223 = vmatpush1.msra.mxu0 0.0
    %2224 = vmatprep.subr.mxu0 0.0
    %2225 = vmatpush1.msra.mxu0 0.0
    %2226 = vmatprep.subr.mxu0 0.0
    %2227 = vmatpush1.msra.mxu0 0.0
    %2228 = vmatprep.subr.mxu0 0.0
    %2229 = vmatpush1.msra.mxu0 0.0
    %2230 = vmatprep.subr.mxu0 0.0
    %2231 = vmatpush1.msra.mxu0 0.0
    %2232 = vmatprep.mubr.f32.mxu0 0.0
    %2233 = vmatmul.mubr.f32.gmra.mrb[0].mxu0 %v2144
    %v2234 = vpop.f32.mrb[0].mxu0
    %v2235 = vadd.f32 %v2166, %v2234
    %v2236 = vpop.f32.mrb[0].mxu0
    %2237 = vdwg.mxu0
    %2238 = vst [vmem:[#allocation14] sm:$0xff] %v2235
    // Predicated region
    $region74: #{tpu_custom_call.1} parent=1 // pred_check
      _
    $region75: #{tpu_custom_call.1} parent=1 // pred_check_branch
      %2240 = sbr.rel (0) target = $region77
    $region76: #{tpu_custom_call.1} parent=1 // pred_region
      %s2242 = ssub.s32 128, 128
      %2243 = vsyncadd [#allocation4], %s2242
      %s2245 = sshll.u32 [#allocation14], 4
      %s2246 = int_to_ptr.vmem [resolvable:$true] %s2245
      %2248 = dma.vmem_to_hbm [thread:$0]  %s2246, 128, %s11, [#allocation4]
    $region77: #{tpu_custom_call.1} parent=1 // pred_fallthru
      _
    // Predicated region
    $region78: #{tpu_custom_call.1} parent=1 // pred_check
      _
    $region79: #{tpu_custom_call.1} parent=1 // pred_check_branch
      %2250 = sbr.rel (0) target = $region81
    $region80: #{tpu_custom_call.1} parent=1 // pred_region
      %2251 = dma.done [#allocation4], 128
    $region81: #{tpu_custom_call.1} parent=1 // pred_fallthru
      _
    %2252 = vsyncpa [#allocation3], 1
    %2253 = vsyncpa [#allocation6], 1
    %2254 = vsyncpa [#allocation9], 1
    %2255 = vsyncpa [#allocation12], 1
    %2256 = vsyncpa [#allocation4], 1

</llo_original>
